<compile_context>
chip_gen: v5e
topology: v5e:2x2
jax: 0.10.0
libtpu: 0.0.40
codegen_flags: <defaults>
</compile_context>

<pallas_src>
import functools

import jax
import jax.numpy as jnp
from jax import lax
from jax.experimental import pallas as pl
from jax.experimental.pallas import tpu as pltpu


def _round_up(v: int, m: int) -> int:
    return (v + m - 1) // m * m


def _gd_kernel(y_ref, x_ref, w0_ref, b0_ref,
               w_out_ref, b_out_ref, logits_ref,
               *, steps: int, lr: float, n_valid: int, unroll_gd: bool):
    """One task-block per grid step. Shapes are pre-padded lane-dense.

      y_ref:      (TB, Np, 1)   int32 labels (rows >= n_valid are padding)
      x_ref:      (TB, Np, Dp)  f32/bf16 inputs
      w0_ref:     (TB, Dp, Cp)  f32 initial weights in (D, C) layout
      b0_ref:     (TB, 1, Cp)   f32 initial bias (padded classes carry -1e30)
      w_out_ref:  (TB, Dp, Cp)  adapted weights (HBM-aliased onto w0)
      b_out_ref:  (TB, 1, Cp)   adapted bias    (HBM-aliased onto b0)
      logits_ref: (TB, Np, Cp)  forward pass of the adapted model; padded
                                rows/classes are garbage — wrapper slices them.
    """
    tb, np_, _ = x_ref.shape
    cp = w0_ref.shape[2]

    # Loop-invariant constants (one vreg each).
    cls = lax.broadcasted_iota(jnp.int32, (np_, cp), 1)
    inv_n = jnp.float32(1.0 / n_valid)
    if n_valid == np_:
        scale = inv_n
    else:
        # Mean-reduction scale, zero for padded batch rows (keeps their bogus
        # default-0 one-hot from contributing to gradients).
        rows = lax.broadcasted_iota(jnp.int32, (np_, 1), 0)
        scale = jnp.where(rows < n_valid, inv_n, jnp.float32(0.0))
    lr_f = jnp.float32(lr)

    # Static loop over the task sub-block (tb is a small compile-time const).
    for ti in range(tb):
        # One-hot targets built in-kernel (no (N, C) HBM round trip). Padded
        # class columns (>= real C) never match a label, so they stay zero.
        yoh = (y_ref[ti] == cls).astype(jnp.float32)              # (Np, Cp)

        def gd_step(_, carry):
            w, b = carry                                 # f32 (Dp,Cp), (1,Cp)
            # Read the MXU operand from VMEM inside the step: vld is cheap and
            # pipelined, and x stays out of the cross-step live ranges.
            x = x_ref[ti]                                # (Np, Dp)
            # forward: logits = x @ W  (W stored (D, C) -> no transpose).
            logits = jnp.dot(x, w.astype(x.dtype),
                             preferred_element_type=jnp.float32) + b
            # softmax-CE gradient wrt logits (mean reduction). Padded classes
            # carry a -1e30 bias (added in f32 after the matmul) -> exp
            # underflows to exactly 0, contributing nothing anywhere.
            m = jnp.max(logits, axis=-1, keepdims=True)
            e = jnp.exp(logits - m)
            # Exact denominator: approx rcp error would compound over steps.
            p = e / jnp.sum(e, axis=-1, keepdims=True)
            dlogits = (p - yoh) * scale                  # (Np, Cp) f32
            # dw = x^T @ dlogits without materializing x^T: contract axis 0 of
            # both operands (transposed-LHS MXU matmul).
            dw = lax.dot_general(x, dlogits.astype(x.dtype),
                                 dimension_numbers=(((0,), (0,)), ((), ())),
                                 preferred_element_type=jnp.float32)
            db = jnp.sum(dlogits, axis=0, keepdims=True)
            # SGD update in f32 (momentum = 0 -> velocity == grad).
            return w - lr_f * dw, b - lr_f * db

        w, b = lax.fori_loop(0, steps, gd_step,
                             (w0_ref[ti], b0_ref[ti]), unroll=unroll_gd)

        w_out_ref[ti] = w
        b_out_ref[ti] = b
        # model.functional(fast_weights)(x)
        x = x_ref[ti]
        logits_ref[ti] = jnp.dot(x, w.astype(x.dtype),
                                 preferred_element_type=jnp.float32) + b


def gd_learner_batched(x, y, w0, b0, *, steps: int, lr: float,
                       task_block=None, matmul_dtype=jnp.float32):
    """Pallas-backed GDLearner.forward for a batch of linear-model tasks.

    Args:
      x:  (T, N, D) float32 inputs (one support batch per task).
      y:  (T, N)    int32 class labels.
      w0: (T, C, D) float32 initial weights (nn.Linear layout).
      b0: (T, C)    float32 initial bias.
      task_block:   tasks processed per grid step (None -> auto).
      matmul_dtype: dtype fed to the MXU (jnp.float32 or jnp.bfloat16);
                    weights, softmax, gradients and updates stay f32.
    Returns:
      (w_adapted (T, C, D), b_adapted (T, C), logits (T, N, C))
    """
    t, n, d = x.shape
    c = w0.shape[1]
    mm_dtype = jnp.dtype(matmul_dtype)

    # Tasks per grid step: amortize the per-grid-step overhead but keep >= 2
    # (even) grid steps when T allows, so both v7x TensorCores are used.
    if task_block is None:
        task_block = max(1, min(8, (t + 1) // 2))
    task_block = int(task_block)
    tp = _round_up(max(t, 1), task_block)

    # Lane-dense padding: classes/features to multiples of 128, batch to 8.
    np_ = _round_up(n, 8)
    dp = _round_up(d, 128)
    cp = _round_up(c, 128)
    neg = jnp.float32(-1e30)

    x_p = jnp.zeros((tp, np_, dp), mm_dtype).at[:t, :n, :d].set(
        x.astype(mm_dtype))
    y_p = jnp.zeros((tp, np_, 1), jnp.int32).at[:t, :n, 0].set(y)
    # Store W as (D, C) inside the kernel: one wrapper-side transpose, zero
    # in-kernel transposes. Weights stay f32 regardless of matmul_dtype.
    w0_p = jnp.zeros((tp, dp, cp), jnp.float32).at[:t, :d, :c].set(
        jnp.transpose(w0, (0, 2, 1)).astype(jnp.float32))
    # Padded class columns get a -1e30 bias -> softmax prob / grad exactly 0.
    b0_p = jnp.full((tp, 1, cp), neg, jnp.float32).at[:t, 0, :c].set(
        b0.astype(jnp.float32))

    # Value-carried full unroll only while W fits comfortably in vregs.
    unroll_gd = (dp * cp * 4 <= 64 * 1024) and (steps <= 8)
    # TODO(synk): for Dp*Cp far beyond vreg capacity, a VMEM-scratch W
    # accumulator with unroll=2-4 would beat the rolled value-carry used here.

    kernel = functools.partial(_gd_kernel, steps=steps, lr=lr, n_valid=n,
                               unroll_gd=unroll_gd)

    def spec(shape):
        zeros = (0,) * len(shape)
        return pl.BlockSpec((task_block,) + shape, lambda i: (i,) + zeros)

    # Explicit VMEM budget: double-buffered blocks + headroom, clamped to the
    # v7x physical 64 MiB so the same code works on 64 and 128 MiB parts.
    blk = task_block * (
        np_ * 128 * 4                        # y (last dim pads to a lane tile)
        + np_ * dp * mm_dtype.itemsize       # x
        + 2 * dp * cp * 4                    # w0 + w_out
        + 2 * 8 * cp * 4                     # b0 + b_out (sublane-padded)
        + np_ * cp * 4)                      # logits
    vmem_limit = int(min(64 * 1024 * 1024, max(32 * 1024 * 1024, 4 * blk)))

    w_a, b_a, logits = pl.pallas_call(
        kernel,
        grid=(tp // task_block,),
        in_specs=[
            spec((np_, 1)),      # y labels
            spec((np_, dp)),     # x
            spec((dp, cp)),      # W0 in (D, C) layout
            spec((1, cp)),       # b0
        ],
        out_specs=[
            spec((dp, cp)),      # adapted W (D, C)
            spec((1, cp)),       # adapted b
            spec((np_, cp)),     # logits of the adapted model
        ],
        out_shape=[
            jax.ShapeDtypeStruct((tp, dp, cp), jnp.float32),
            jax.ShapeDtypeStruct((tp, 1, cp), jnp.float32),
            jax.ShapeDtypeStruct((tp, np_, cp), jnp.float32),
        ],
        # Reuse the freshly-padded w0/b0 HBM buffers for the adapted outputs.
        input_output_aliases={2: 0, 3: 1},
        compiler_params=pltpu.CompilerParams(
            # Independent task blocks -> shard across v7x's 2 TCs (megacore).
            dimension_semantics=("parallel",),
            vmem_limit_bytes=vmem_limit),
    )(y_p, x_p, w0_p, b0_p)

    w_adapt = jnp.transpose(w_a[:t, :d, :c], (0, 2, 1))        # back to (C, D)
    b_adapt = b_a[:t, 0, :c]
    return w_adapt, b_adapt, logits[:t, :n, :c]


def gd_learner(x, y, w0, b0, *, steps: int, lr: float):
    """Single-task convenience wrapper (matches the original signature)."""
    w_a, b_a, lg = gd_learner_batched(x[None], y[None], w0[None], b0[None],
                                      steps=steps, lr=lr)
    return w_a[0], b_a[0], lg[0]


def _reference(x, y, w0, b0, *, steps, lr):
    """Pure-JAX reference of the same GD loop (for sanity checking)."""
    c = w0.shape[0]
    n = x.shape[0]
    yoh = jax.nn.one_hot(y, c, dtype=jnp.float32)
    w, b = w0, b0
    for _ in range(steps):
        logits = x @ w.T + b
        p = jax.nn.softmax(logits, axis=-1)
        dlogits = (p - yoh) / n
        w = w - lr * (dlogits.T @ x)
        b = b - lr * jnp.sum(dlogits, axis=0)
    return w, b, x @ w.T + b


if __name__ == "__main__":
    # Small shapes: a meta-batch of T tasks, each an 8x32 -> 8-class problem.
    T, N, D, C = 4, 8, 32, 8
    STEPS, LR = 3, 0.1

    key = jax.random.PRNGKey(0)
    kx, ky, kw, kb = jax.random.split(key, 4)
    x = jax.random.normal(kx, (T, N, D), dtype=jnp.float32)
    y = jax.random.randint(ky, (T, N), 0, C, dtype=jnp.int32)
    w0 = jax.random.normal(kw, (T, C, D), dtype=jnp.float32) * 0.1
    b0 = jax.random.normal(kb, (T, C), dtype=jnp.float32) * 0.1

    # f32 path (default): matches the PyTorch semantics tightly.
    w_a, b_a, logits = gd_learner_batched(x, y, w0, b0, steps=STEPS, lr=LR)
    jax.block_until_ready((w_a, b_a, logits))

    for ti in range(T):
        w_r, b_r, lg_r = _reference(x[ti], y[ti], w0[ti], b0[ti],
                                    steps=STEPS, lr=LR)
        assert jnp.allclose(w_a[ti], w_r, atol=1e-3, rtol=1e-3), "W mismatch"
        assert jnp.allclose(b_a[ti], b_r, atol=1e-3, rtol=1e-3), "b mismatch"
        assert jnp.allclose(logits[ti], lg_r, atol=1e-3, rtol=1e-3), \
            "logits mismatch"

    # bf16-MXU path (halves x HBM bytes, bf16-native MXU on all chips);
    # weights / softmax / gradients / SGD update stay f32. Loose tolerance.
    w_b, b_b, lg_b = gd_learner_batched(x, y, w0, b0, steps=STEPS, lr=LR,
                                        matmul_dtype=jnp.bfloat16)
    jax.block_until_ready((w_b, b_b, lg_b))
    assert jnp.allclose(w_b, w_a, atol=5e-2, rtol=5e-2), "bf16 W drift"
    assert jnp.allclose(lg_b, logits, atol=5e-2, rtol=5e-2), "bf16 logits drift"

    print("KERNEL_OK")
</pallas_src>

<mosaic_0001>
module attributes {stable_mosaic.version = 11 : i64} {
  func.func @_gd_kernel(%arg0: i32, %arg1: memref<2x8x1xi32, #tpu.memory_space<vmem>>, %arg2: memref<2x8x128xf32, #tpu.memory_space<vmem>>, %arg3: memref<2x128x128xf32, #tpu.memory_space<vmem>>, %arg4: memref<2x1x128xf32, #tpu.memory_space<vmem>>, %arg5: memref<2x128x128xf32, #tpu.memory_space<vmem>>, %arg6: memref<2x1x128xf32, #tpu.memory_space<vmem>>, %arg7: memref<2x8x128xf32, #tpu.memory_space<vmem>>) attributes {dimension_semantics = [#tpu.dimension_semantics<parallel>], iteration_bounds = array<i64: 2>, scalar_prefetch = 0 : i64, scratch_operands = 0 : i64, tpu.core_type = #tpu.core_type<tc>, window_params = [{transform_indices = @transform_0, window_bounds = array<i64: 2, 8, 1>}, {transform_indices = @transform_1, window_bounds = array<i64: 2, 8, 128>}, {transform_indices = @transform_2, window_bounds = array<i64: 2, 128, 128>}, {transform_indices = @transform_3, window_bounds = array<i64: 2, 1, 128>}, {transform_indices = @transform_4, window_bounds = array<i64: 2, 128, 128>}, {transform_indices = @transform_5, window_bounds = array<i64: 2, 1, 128>}, {transform_indices = @transform_6, window_bounds = array<i64: 2, 8, 128>}]} {
    %0 = tpu.iota {dimensions = array<i32: 1>} : vector<8x128xi32>
    %c0 = arith.constant 0 : index
    %c0_0 = arith.constant 0 : index
    %c0_1 = arith.constant 0 : index
    %1 = vector.load %arg1[%c0, %c0_0, %c0_1] : memref<2x8x1xi32, #tpu.memory_space<vmem>>, vector<1x8x1xi32>
    %2 = vector.shape_cast %1 : vector<1x8x1xi32> to vector<8x1xi32>
    %3 = vector.broadcast %2 : vector<8x1xi32> to vector<8x128xi32>
    %4 = arith.cmpi eq, %3, %0 : vector<8x128xi32>
    %5 = arith.extui %4 : vector<8x128xi1> to vector<8x128xi32>
    %6 = arith.sitofp %5 : vector<8x128xi32> to vector<8x128xf32>
    %c0_2 = arith.constant 0 : index
    %c0_3 = arith.constant 0 : index
    %c0_4 = arith.constant 0 : index
    %7 = vector.load %arg3[%c0_2, %c0_3, %c0_4] : memref<2x128x128xf32, #tpu.memory_space<vmem>>, vector<1x128x128xf32>
    %8 = vector.shape_cast %7 : vector<1x128x128xf32> to vector<128x128xf32>
    %c0_5 = arith.constant 0 : index
    %c0_6 = arith.constant 0 : index
    %c0_7 = arith.constant 0 : index
    %9 = vector.load %arg4[%c0_5, %c0_6, %c0_7] : memref<2x1x128xf32, #tpu.memory_space<vmem>>, vector<1x1x128xf32>
    %10 = vector.shape_cast %9 : vector<1x1x128xf32> to vector<1x128xf32>
    %cst = arith.constant 1.250000e-01 : f32
    %cst_8 = arith.constant 1.000000e-01 : f32
    %c0_i32 = arith.constant 0 : i32
    %c0_9 = arith.constant 0 : index
    %c0_10 = arith.constant 0 : index
    %c0_11 = arith.constant 0 : index
    %11 = vector.load %arg2[%c0_9, %c0_10, %c0_11] : memref<2x8x128xf32, #tpu.memory_space<vmem>>, vector<1x8x128xf32>
    %12 = vector.shape_cast %11 : vector<1x8x128xf32> to vector<8x128xf32>
    %cst_12 = arith.constant dense<0.000000e+00> : vector<8x128xf32>
    %13 = tpu.matmul %12, %8, %cst_12 {dimension_numbers = #tpu.dot_dimension_numbers<[1], [0], [0], [1], [0, 0, 1, 1], [], []>} : vector<8x128xf32>, vector<128x128xf32>, vector<8x128xf32> -> vector<8x128xf32>
    %14 = vector.broadcast %10 : vector<1x128xf32> to vector<8x128xf32>
    %15 = arith.addf %13, %14 : vector<8x128xf32>
    %cst_13 = arith.constant dense<0xFF800000> : vector<8xf32>
    %16 = vector.multi_reduction <maximumf>, %15, %cst_13 [1] : vector<8x128xf32> to vector<8xf32>
    %17 = vector.shape_cast %16 : vector<8xf32> to vector<8x1xf32>
    %18 = vector.broadcast %17 : vector<8x1xf32> to vector<8x128xf32>
    %19 = arith.subf %15, %18 : vector<8x128xf32>
    %20 = math.exp %19 : vector<8x128xf32>
    %cst_14 = arith.constant dense<0.000000e+00> : vector<8xf32>
    %21 = vector.multi_reduction <add>, %20, %cst_14 [1] : vector<8x128xf32> to vector<8xf32>
    %22 = vector.shape_cast %21 : vector<8xf32> to vector<8x1xf32>
    %23 = vector.broadcast %22 : vector<8x1xf32> to vector<8x128xf32>
    %24 = arith.divf %20, %23 : vector<8x128xf32>
    %25 = arith.subf %24, %6 : vector<8x128xf32>
    %26 = vector.broadcast %cst : f32 to vector<8x128xf32>
    %27 = arith.mulf %25, %26 : vector<8x128xf32>
    %cst_15 = arith.constant dense<0.000000e+00> : vector<128x128xf32>
    %28 = tpu.matmul %12, %27, %cst_15 {dimension_numbers = #tpu.dot_dimension_numbers<[0], [0], [1], [1], [0, 1, 1, 1], [], []>} : vector<8x128xf32>, vector<8x128xf32>, vector<128x128xf32> -> vector<128x128xf32>
    %cst_16 = arith.constant dense<0.000000e+00> : vector<128xf32>
    %29 = vector.multi_reduction <add>, %27, %cst_16 [0] : vector<8x128xf32> to vector<128xf32>
    %30 = vector.shape_cast %29 : vector<128xf32> to vector<1x128xf32>
    %31 = vector.broadcast %cst_8 : f32 to vector<128x128xf32>
    %32 = arith.mulf %31, %28 : vector<128x128xf32>
    %33 = arith.subf %8, %32 : vector<128x128xf32>
    %34 = vector.broadcast %cst_8 : f32 to vector<1x128xf32>
    %35 = arith.mulf %34, %30 : vector<1x128xf32>
    %36 = arith.subf %10, %35 : vector<1x128xf32>
    %c1_i32 = arith.constant 1 : i32
    %c0_17 = arith.constant 0 : index
    %c0_18 = arith.constant 0 : index
    %c0_19 = arith.constant 0 : index
    %37 = vector.load %arg2[%c0_17, %c0_18, %c0_19] : memref<2x8x128xf32, #tpu.memory_space<vmem>>, vector<1x8x128xf32>
    %38 = vector.shape_cast %37 : vector<1x8x128xf32> to vector<8x128xf32>
    %cst_20 = arith.constant dense<0.000000e+00> : vector<8x128xf32>
    %39 = tpu.matmul %38, %33, %cst_20 {dimension_numbers = #tpu.dot_dimension_numbers<[1], [0], [0], [1], [0, 0, 1, 1], [], []>} : vector<8x128xf32>, vector<128x128xf32>, vector<8x128xf32> -> vector<8x128xf32>
    %40 = vector.broadcast %36 : vector<1x128xf32> to vector<8x128xf32>
    %41 = arith.addf %39, %40 : vector<8x128xf32>
    %cst_21 = arith.constant dense<0xFF800000> : vector<8xf32>
    %42 = vector.multi_reduction <maximumf>, %41, %cst_21 [1] : vector<8x128xf32> to vector<8xf32>
    %43 = vector.shape_cast %42 : vector<8xf32> to vector<8x1xf32>
    %44 = vector.broadcast %43 : vector<8x1xf32> to vector<8x128xf32>
    %45 = arith.subf %41, %44 : vector<8x128xf32>
    %46 = math.exp %45 : vector<8x128xf32>
    %cst_22 = arith.constant dense<0.000000e+00> : vector<8xf32>
    %47 = vector.multi_reduction <add>, %46, %cst_22 [1] : vector<8x128xf32> to vector<8xf32>
    %48 = vector.shape_cast %47 : vector<8xf32> to vector<8x1xf32>
    %49 = vector.broadcast %48 : vector<8x1xf32> to vector<8x128xf32>
    %50 = arith.divf %46, %49 : vector<8x128xf32>
    %51 = arith.subf %50, %6 : vector<8x128xf32>
    %52 = vector.broadcast %cst : f32 to vector<8x128xf32>
    %53 = arith.mulf %51, %52 : vector<8x128xf32>
    %cst_23 = arith.constant dense<0.000000e+00> : vector<128x128xf32>
    %54 = tpu.matmul %38, %53, %cst_23 {dimension_numbers = #tpu.dot_dimension_numbers<[0], [0], [1], [1], [0, 1, 1, 1], [], []>} : vector<8x128xf32>, vector<8x128xf32>, vector<128x128xf32> -> vector<128x128xf32>
    %cst_24 = arith.constant dense<0.000000e+00> : vector<128xf32>
    %55 = vector.multi_reduction <add>, %53, %cst_24 [0] : vector<8x128xf32> to vector<128xf32>
    %56 = vector.shape_cast %55 : vector<128xf32> to vector<1x128xf32>
    %57 = vector.broadcast %cst_8 : f32 to vector<128x128xf32>
    %58 = arith.mulf %57, %54 : vector<128x128xf32>
    %59 = arith.subf %33, %58 : vector<128x128xf32>
    %60 = vector.broadcast %cst_8 : f32 to vector<1x128xf32>
    %61 = arith.mulf %60, %56 : vector<1x128xf32>
    %62 = arith.subf %36, %61 : vector<1x128xf32>
    %c2_i32 = arith.constant 2 : i32
    %c0_25 = arith.constant 0 : index
    %c0_26 = arith.constant 0 : index
    %c0_27 = arith.constant 0 : index
    %63 = vector.load %arg2[%c0_25, %c0_26, %c0_27] : memref<2x8x128xf32, #tpu.memory_space<vmem>>, vector<1x8x128xf32>
    %64 = vector.shape_cast %63 : vector<1x8x128xf32> to vector<8x128xf32>
    %cst_28 = arith.constant dense<0.000000e+00> : vector<8x128xf32>
    %65 = tpu.matmul %64, %59, %cst_28 {dimension_numbers = #tpu.dot_dimension_numbers<[1], [0], [0], [1], [0, 0, 1, 1], [], []>} : vector<8x128xf32>, vector<128x128xf32>, vector<8x128xf32> -> vector<8x128xf32>
    %66 = vector.broadcast %62 : vector<1x128xf32> to vector<8x128xf32>
    %67 = arith.addf %65, %66 : vector<8x128xf32>
    %cst_29 = arith.constant dense<0xFF800000> : vector<8xf32>
    %68 = vector.multi_reduction <maximumf>, %67, %cst_29 [1] : vector<8x128xf32> to vector<8xf32>
    %69 = vector.shape_cast %68 : vector<8xf32> to vector<8x1xf32>
    %70 = vector.broadcast %69 : vector<8x1xf32> to vector<8x128xf32>
    %71 = arith.subf %67, %70 : vector<8x128xf32>
    %72 = math.exp %71 : vector<8x128xf32>
    %cst_30 = arith.constant dense<0.000000e+00> : vector<8xf32>
    %73 = vector.multi_reduction <add>, %72, %cst_30 [1] : vector<8x128xf32> to vector<8xf32>
    %74 = vector.shape_cast %73 : vector<8xf32> to vector<8x1xf32>
    %75 = vector.broadcast %74 : vector<8x1xf32> to vector<8x128xf32>
    %76 = arith.divf %72, %75 : vector<8x128xf32>
    %77 = arith.subf %76, %6 : vector<8x128xf32>
    %78 = vector.broadcast %cst : f32 to vector<8x128xf32>
    %79 = arith.mulf %77, %78 : vector<8x128xf32>
    %cst_31 = arith.constant dense<0.000000e+00> : vector<128x128xf32>
    %80 = tpu.matmul %64, %79, %cst_31 {dimension_numbers = #tpu.dot_dimension_numbers<[0], [0], [1], [1], [0, 1, 1, 1], [], []>} : vector<8x128xf32>, vector<8x128xf32>, vector<128x128xf32> -> vector<128x128xf32>
    %cst_32 = arith.constant dense<0.000000e+00> : vector<128xf32>
    %81 = vector.multi_reduction <add>, %79, %cst_32 [0] : vector<8x128xf32> to vector<128xf32>
    %82 = vector.shape_cast %81 : vector<128xf32> to vector<1x128xf32>
    %83 = vector.broadcast %cst_8 : f32 to vector<128x128xf32>
    %84 = arith.mulf %83, %80 : vector<128x128xf32>
    %85 = arith.subf %59, %84 : vector<128x128xf32>
    %86 = vector.broadcast %cst_8 : f32 to vector<1x128xf32>
    %87 = arith.mulf %86, %82 : vector<1x128xf32>
    %88 = arith.subf %62, %87 : vector<1x128xf32>
    %c0_33 = arith.constant 0 : index
    %c0_34 = arith.constant 0 : index
    %c0_35 = arith.constant 0 : index
    %89 = vector.load %arg5[%c0_33, %c0_34, %c0_35] : memref<2x128x128xf32, #tpu.memory_space<vmem>>, vector<1x128x128xf32>
    %90 = vector.shape_cast %89 : vector<1x128x128xf32> to vector<128x128xf32>
    %91 = vector.shape_cast %85 : vector<128x128xf32> to vector<1x128x128xf32>
    tpu.vector_store %arg5[%c0_33, %c0_34, %c0_35], %91 {strides = array<i32>} : memref<2x128x128xf32, #tpu.memory_space<vmem>>, vector<1x128x128xf32>,
    %c0_36 = arith.constant 0 : index
    %c0_37 = arith.constant 0 : index
    %c0_38 = arith.constant 0 : index
    %92 = vector.load %arg6[%c0_36, %c0_37, %c0_38] : memref<2x1x128xf32, #tpu.memory_space<vmem>>, vector<1x1x128xf32>
    %93 = vector.shape_cast %92 : vector<1x1x128xf32> to vector<1x128xf32>
    %94 = vector.shape_cast %88 : vector<1x128xf32> to vector<1x1x128xf32>
    tpu.vector_store %arg6[%c0_36, %c0_37, %c0_38], %94 {strides = array<i32>} : memref<2x1x128xf32, #tpu.memory_space<vmem>>, vector<1x1x128xf32>,
    %c0_39 = arith.constant 0 : index
    %c0_40 = arith.constant 0 : index
    %c0_41 = arith.constant 0 : index
    %95 = vector.load %arg2[%c0_39, %c0_40, %c0_41] : memref<2x8x128xf32, #tpu.memory_space<vmem>>, vector<1x8x128xf32>
    %96 = vector.shape_cast %95 : vector<1x8x128xf32> to vector<8x128xf32>
    %cst_42 = arith.constant dense<0.000000e+00> : vector<8x128xf32>
    %97 = tpu.matmul %96, %85, %cst_42 {dimension_numbers = #tpu.dot_dimension_numbers<[1], [0], [0], [1], [0, 0, 1, 1], [], []>} : vector<8x128xf32>, vector<128x128xf32>, vector<8x128xf32> -> vector<8x128xf32>
    %98 = vector.broadcast %88 : vector<1x128xf32> to vector<8x128xf32>
    %99 = arith.addf %97, %98 : vector<8x128xf32>
    %c0_43 = arith.constant 0 : index
    %c0_44 = arith.constant 0 : index
    %c0_45 = arith.constant 0 : index
    %100 = vector.load %arg7[%c0_43, %c0_44, %c0_45] : memref<2x8x128xf32, #tpu.memory_space<vmem>>, vector<1x8x128xf32>
    %101 = vector.shape_cast %100 : vector<1x8x128xf32> to vector<8x128xf32>
    %102 = vector.shape_cast %99 : vector<8x128xf32> to vector<1x8x128xf32>
    tpu.vector_store %arg7[%c0_43, %c0_44, %c0_45], %102 {strides = array<i32>} : memref<2x8x128xf32, #tpu.memory_space<vmem>>, vector<1x8x128xf32>,
    %c1 = arith.constant 1 : index
    %c0_46 = arith.constant 0 : index
    %c0_47 = arith.constant 0 : index
    %103 = vector.load %arg1[%c1, %c0_46, %c0_47] : memref<2x8x1xi32, #tpu.memory_space<vmem>>, vector<1x8x1xi32>
    %104 = vector.shape_cast %103 : vector<1x8x1xi32> to vector<8x1xi32>
    %105 = vector.broadcast %104 : vector<8x1xi32> to vector<8x128xi32>
    %106 = arith.cmpi eq, %105, %0 : vector<8x128xi32>
    %107 = arith.extui %106 : vector<8x128xi1> to vector<8x128xi32>
    %108 = arith.sitofp %107 : vector<8x128xi32> to vector<8x128xf32>
    %c1_48 = arith.constant 1 : index
    %c0_49 = arith.constant 0 : index
    %c0_50 = arith.constant 0 : index
    %109 = vector.load %arg3[%c1_48, %c0_49, %c0_50] : memref<2x128x128xf32, #tpu.memory_space<vmem>>, vector<1x128x128xf32>
    %110 = vector.shape_cast %109 : vector<1x128x128xf32> to vector<128x128xf32>
    %c1_51 = arith.constant 1 : index
    %c0_52 = arith.constant 0 : index
    %c0_53 = arith.constant 0 : index
    %111 = vector.load %arg4[%c1_51, %c0_52, %c0_53] : memref<2x1x128xf32, #tpu.memory_space<vmem>>, vector<1x1x128xf32>
    %112 = vector.shape_cast %111 : vector<1x1x128xf32> to vector<1x128xf32>
    %cst_54 = arith.constant 1.250000e-01 : f32
    %cst_55 = arith.constant 1.000000e-01 : f32
    %c0_i32_56 = arith.constant 0 : i32
    %c1_57 = arith.constant 1 : index
    %c0_58 = arith.constant 0 : index
    %c0_59 = arith.constant 0 : index
    %113 = vector.load %arg2[%c1_57, %c0_58, %c0_59] : memref<2x8x128xf32, #tpu.memory_space<vmem>>, vector<1x8x128xf32>
    %114 = vector.shape_cast %113 : vector<1x8x128xf32> to vector<8x128xf32>
    %cst_60 = arith.constant dense<0.000000e+00> : vector<8x128xf32>
    %115 = tpu.matmul %114, %110, %cst_60 {dimension_numbers = #tpu.dot_dimension_numbers<[1], [0], [0], [1], [0, 0, 1, 1], [], []>} : vector<8x128xf32>, vector<128x128xf32>, vector<8x128xf32> -> vector<8x128xf32>
    %116 = vector.broadcast %112 : vector<1x128xf32> to vector<8x128xf32>
    %117 = arith.addf %115, %116 : vector<8x128xf32>
    %cst_61 = arith.constant dense<0xFF800000> : vector<8xf32>
    %118 = vector.multi_reduction <maximumf>, %117, %cst_61 [1] : vector<8x128xf32> to vector<8xf32>
    %119 = vector.shape_cast %118 : vector<8xf32> to vector<8x1xf32>
    %120 = vector.broadcast %119 : vector<8x1xf32> to vector<8x128xf32>
    %121 = arith.subf %117, %120 : vector<8x128xf32>
    %122 = math.exp %121 : vector<8x128xf32>
    %cst_62 = arith.constant dense<0.000000e+00> : vector<8xf32>
    %123 = vector.multi_reduction <add>, %122, %cst_62 [1] : vector<8x128xf32> to vector<8xf32>
    %124 = vector.shape_cast %123 : vector<8xf32> to vector<8x1xf32>
    %125 = vector.broadcast %124 : vector<8x1xf32> to vector<8x128xf32>
    %126 = arith.divf %122, %125 : vector<8x128xf32>
    %127 = arith.subf %126, %108 : vector<8x128xf32>
    %128 = vector.broadcast %cst_54 : f32 to vector<8x128xf32>
    %129 = arith.mulf %127, %128 : vector<8x128xf32>
    %cst_63 = arith.constant dense<0.000000e+00> : vector<128x128xf32>
    %130 = tpu.matmul %114, %129, %cst_63 {dimension_numbers = #tpu.dot_dimension_numbers<[0], [0], [1], [1], [0, 1, 1, 1], [], []>} : vector<8x128xf32>, vector<8x128xf32>, vector<128x128xf32> -> vector<128x128xf32>
    %cst_64 = arith.constant dense<0.000000e+00> : vector<128xf32>
    %131 = vector.multi_reduction <add>, %129, %cst_64 [0] : vector<8x128xf32> to vector<128xf32>
    %132 = vector.shape_cast %131 : vector<128xf32> to vector<1x128xf32>
    %133 = vector.broadcast %cst_55 : f32 to vector<128x128xf32>
    %134 = arith.mulf %133, %130 : vector<128x128xf32>
    %135 = arith.subf %110, %134 : vector<128x128xf32>
    %136 = vector.broadcast %cst_55 : f32 to vector<1x128xf32>
    %137 = arith.mulf %136, %132 : vector<1x128xf32>
    %138 = arith.subf %112, %137 : vector<1x128xf32>
    %c1_i32_65 = arith.constant 1 : i32
    %c1_66 = arith.constant 1 : index
    %c0_67 = arith.constant 0 : index
    %c0_68 = arith.constant 0 : index
    %139 = vector.load %arg2[%c1_66, %c0_67, %c0_68] : memref<2x8x128xf32, #tpu.memory_space<vmem>>, vector<1x8x128xf32>
    %140 = vector.shape_cast %139 : vector<1x8x128xf32> to vector<8x128xf32>
    %cst_69 = arith.constant dense<0.000000e+00> : vector<8x128xf32>
    %141 = tpu.matmul %140, %135, %cst_69 {dimension_numbers = #tpu.dot_dimension_numbers<[1], [0], [0], [1], [0, 0, 1, 1], [], []>} : vector<8x128xf32>, vector<128x128xf32>, vector<8x128xf32> -> vector<8x128xf32>
    %142 = vector.broadcast %138 : vector<1x128xf32> to vector<8x128xf32>
    %143 = arith.addf %141, %142 : vector<8x128xf32>
    %cst_70 = arith.constant dense<0xFF800000> : vector<8xf32>
    %144 = vector.multi_reduction <maximumf>, %143, %cst_70 [1] : vector<8x128xf32> to vector<8xf32>
    %145 = vector.shape_cast %144 : vector<8xf32> to vector<8x1xf32>
    %146 = vector.broadcast %145 : vector<8x1xf32> to vector<8x128xf32>
    %147 = arith.subf %143, %146 : vector<8x128xf32>
    %148 = math.exp %147 : vector<8x128xf32>
    %cst_71 = arith.constant dense<0.000000e+00> : vector<8xf32>
    %149 = vector.multi_reduction <add>, %148, %cst_71 [1] : vector<8x128xf32> to vector<8xf32>
    %150 = vector.shape_cast %149 : vector<8xf32> to vector<8x1xf32>
    %151 = vector.broadcast %150 : vector<8x1xf32> to vector<8x128xf32>
    %152 = arith.divf %148, %151 : vector<8x128xf32>
    %153 = arith.subf %152, %108 : vector<8x128xf32>
    %154 = vector.broadcast %cst_54 : f32 to vector<8x128xf32>
    %155 = arith.mulf %153, %154 : vector<8x128xf32>
    %cst_72 = arith.constant dense<0.000000e+00> : vector<128x128xf32>
    %156 = tpu.matmul %140, %155, %cst_72 {dimension_numbers = #tpu.dot_dimension_numbers<[0], [0], [1], [1], [0, 1, 1, 1], [], []>} : vector<8x128xf32>, vector<8x128xf32>, vector<128x128xf32> -> vector<128x128xf32>
    %cst_73 = arith.constant dense<0.000000e+00> : vector<128xf32>
    %157 = vector.multi_reduction <add>, %155, %cst_73 [0] : vector<8x128xf32> to vector<128xf32>
    %158 = vector.shape_cast %157 : vector<128xf32> to vector<1x128xf32>
    %159 = vector.broadcast %cst_55 : f32 to vector<128x128xf32>
    %160 = arith.mulf %159, %156 : vector<128x128xf32>
    %161 = arith.subf %135, %160 : vector<128x128xf32>
    %162 = vector.broadcast %cst_55 : f32 to vector<1x128xf32>
    %163 = arith.mulf %162, %158 : vector<1x128xf32>
    %164 = arith.subf %138, %163 : vector<1x128xf32>
    %c2_i32_74 = arith.constant 2 : i32
    %c1_75 = arith.constant 1 : index
    %c0_76 = arith.constant 0 : index
    %c0_77 = arith.constant 0 : index
    %165 = vector.load %arg2[%c1_75, %c0_76, %c0_77] : memref<2x8x128xf32, #tpu.memory_space<vmem>>, vector<1x8x128xf32>
    %166 = vector.shape_cast %165 : vector<1x8x128xf32> to vector<8x128xf32>
    %cst_78 = arith.constant dense<0.000000e+00> : vector<8x128xf32>
    %167 = tpu.matmul %166, %161, %cst_78 {dimension_numbers = #tpu.dot_dimension_numbers<[1], [0], [0], [1], [0, 0, 1, 1], [], []>} : vector<8x128xf32>, vector<128x128xf32>, vector<8x128xf32> -> vector<8x128xf32>
    %168 = vector.broadcast %164 : vector<1x128xf32> to vector<8x128xf32>
    %169 = arith.addf %167, %168 : vector<8x128xf32>
    %cst_79 = arith.constant dense<0xFF800000> : vector<8xf32>
    %170 = vector.multi_reduction <maximumf>, %169, %cst_79 [1] : vector<8x128xf32> to vector<8xf32>
    %171 = vector.shape_cast %170 : vector<8xf32> to vector<8x1xf32>
    %172 = vector.broadcast %171 : vector<8x1xf32> to vector<8x128xf32>
    %173 = arith.subf %169, %172 : vector<8x128xf32>
    %174 = math.exp %173 : vector<8x128xf32>
    %cst_80 = arith.constant dense<0.000000e+00> : vector<8xf32>
    %175 = vector.multi_reduction <add>, %174, %cst_80 [1] : vector<8x128xf32> to vector<8xf32>
    %176 = vector.shape_cast %175 : vector<8xf32> to vector<8x1xf32>
    %177 = vector.broadcast %176 : vector<8x1xf32> to vector<8x128xf32>
    %178 = arith.divf %174, %177 : vector<8x128xf32>
    %179 = arith.subf %178, %108 : vector<8x128xf32>
    %180 = vector.broadcast %cst_54 : f32 to vector<8x128xf32>
    %181 = arith.mulf %179, %180 : vector<8x128xf32>
    %cst_81 = arith.constant dense<0.000000e+00> : vector<128x128xf32>
    %182 = tpu.matmul %166, %181, %cst_81 {dimension_numbers = #tpu.dot_dimension_numbers<[0], [0], [1], [1], [0, 1, 1, 1], [], []>} : vector<8x128xf32>, vector<8x128xf32>, vector<128x128xf32> -> vector<128x128xf32>
    %cst_82 = arith.constant dense<0.000000e+00> : vector<128xf32>
    %183 = vector.multi_reduction <add>, %181, %cst_82 [0] : vector<8x128xf32> to vector<128xf32>
    %184 = vector.shape_cast %183 : vector<128xf32> to vector<1x128xf32>
    %185 = vector.broadcast %cst_55 : f32 to vector<128x128xf32>
    %186 = arith.mulf %185, %182 : vector<128x128xf32>
    %187 = arith.subf %161, %186 : vector<128x128xf32>
    %188 = vector.broadcast %cst_55 : f32 to vector<1x128xf32>
    %189 = arith.mulf %188, %184 : vector<1x128xf32>
    %190 = arith.subf %164, %189 : vector<1x128xf32>
    %c1_83 = arith.constant 1 : index
    %c0_84 = arith.constant 0 : index
    %c0_85 = arith.constant 0 : index
    %191 = vector.load %arg5[%c1_83, %c0_84, %c0_85] : memref<2x128x128xf32, #tpu.memory_space<vmem>>, vector<1x128x128xf32>
    %192 = vector.shape_cast %191 : vector<1x128x128xf32> to vector<128x128xf32>
    %193 = vector.shape_cast %187 : vector<128x128xf32> to vector<1x128x128xf32>
    tpu.vector_store %arg5[%c1_83, %c0_84, %c0_85], %193 {strides = array<i32>} : memref<2x128x128xf32, #tpu.memory_space<vmem>>, vector<1x128x128xf32>,
    %c1_86 = arith.constant 1 : index
    %c0_87 = arith.constant 0 : index
    %c0_88 = arith.constant 0 : index
    %194 = vector.load %arg6[%c1_86, %c0_87, %c0_88] : memref<2x1x128xf32, #tpu.memory_space<vmem>>, vector<1x1x128xf32>
    %195 = vector.shape_cast %194 : vector<1x1x128xf32> to vector<1x128xf32>
    %196 = vector.shape_cast %190 : vector<1x128xf32> to vector<1x1x128xf32>
    tpu.vector_store %arg6[%c1_86, %c0_87, %c0_88], %196 {strides = array<i32>} : memref<2x1x128xf32, #tpu.memory_space<vmem>>, vector<1x1x128xf32>,
    %c1_89 = arith.constant 1 : index
    %c0_90 = arith.constant 0 : index
    %c0_91 = arith.constant 0 : index
    %197 = vector.load %arg2[%c1_89, %c0_90, %c0_91] : memref<2x8x128xf32, #tpu.memory_space<vmem>>, vector<1x8x128xf32>
    %198 = vector.shape_cast %197 : vector<1x8x128xf32> to vector<8x128xf32>
    %cst_92 = arith.constant dense<0.000000e+00> : vector<8x128xf32>
    %199 = tpu.matmul %198, %187, %cst_92 {dimension_numbers = #tpu.dot_dimension_numbers<[1], [0], [0], [1], [0, 0, 1, 1], [], []>} : vector<8x128xf32>, vector<128x128xf32>, vector<8x128xf32> -> vector<8x128xf32>
    %200 = vector.broadcast %190 : vector<1x128xf32> to vector<8x128xf32>
    %201 = arith.addf %199, %200 : vector<8x128xf32>
    %c1_93 = arith.constant 1 : index
    %c0_94 = arith.constant 0 : index
    %c0_95 = arith.constant 0 : index
    %202 = vector.load %arg7[%c1_93, %c0_94, %c0_95] : memref<2x8x128xf32, #tpu.memory_space<vmem>>, vector<1x8x128xf32>
    %203 = vector.shape_cast %202 : vector<1x8x128xf32> to vector<8x128xf32>
    %204 = vector.shape_cast %201 : vector<8x128xf32> to vector<1x8x128xf32>
    tpu.vector_store %arg7[%c1_93, %c0_94, %c0_95], %204 {strides = array<i32>} : memref<2x8x128xf32, #tpu.memory_space<vmem>>, vector<1x8x128xf32>,
    return
  }
  func.func @transform_0(%arg0: i32) -> (i32, i32, i32) {
    %c0_i32 = arith.constant 0 : i32
    %c0_i32_0 = arith.constant 0 : i32
    %c0_i32_1 = arith.constant 0 : i32
    return %arg0, %c0_i32, %c0_i32_0 : i32, i32, i32
  }
  func.func @transform_1(%arg0: i32) -> (i32, i32, i32) {
    %c0_i32 = arith.constant 0 : i32
    %c0_i32_0 = arith.constant 0 : i32
    %c0_i32_1 = arith.constant 0 : i32
    return %arg0, %c0_i32, %c0_i32_0 : i32, i32, i32
  }
  func.func @transform_2(%arg0: i32) -> (i32, i32, i32) {
    %c0_i32 = arith.constant 0 : i32
    %c0_i32_0 = arith.constant 0 : i32
    %c0_i32_1 = arith.constant 0 : i32
    return %arg0, %c0_i32, %c0_i32_0 : i32, i32, i32
  }
  func.func @transform_3(%arg0: i32) -> (i32, i32, i32) {
    %c0_i32 = arith.constant 0 : i32
    %c0_i32_0 = arith.constant 0 : i32
    %c0_i32_1 = arith.constant 0 : i32
    return %arg0, %c0_i32, %c0_i32_0 : i32, i32, i32
  }
  func.func @transform_4(%arg0: i32) -> (i32, i32, i32) {
    %c0_i32 = arith.constant 0 : i32
    %c0_i32_0 = arith.constant 0 : i32
    %c0_i32_1 = arith.constant 0 : i32
    return %arg0, %c0_i32, %c0_i32_0 : i32, i32, i32
  }
  func.func @transform_5(%arg0: i32) -> (i32, i32, i32) {
    %c0_i32 = arith.constant 0 : i32
    %c0_i32_0 = arith.constant 0 : i32
    %c0_i32_1 = arith.constant 0 : i32
    return %arg0, %c0_i32, %c0_i32_0 : i32, i32, i32
  }
  func.func @transform_6(%arg0: i32) -> (i32, i32, i32) {
    %c0_i32 = arith.constant 0 : i32
    %c0_i32_0 = arith.constant 0 : i32
    %c0_i32_1 = arith.constant 0 : i32
    return %arg0, %c0_i32, %c0_i32_0 : i32, i32, i32
  }
}

</mosaic_0001>

<llo_original>
// kernel: tpu_custom_call.1
$region0: #{tpu_custom_call.1}
  #allocation0 [shape = 'u32[]', space=smem, size = 0x4, offset = 0x4, fixed_abs, tag = 'smem constant byte address 0x4 - core index']
  #allocation1 [shape = 'u32[72,128]{1,0:T(1,128)}', space=vmem, size = 0x9000, scoped, tag = 'internal scratch']
  %s0 = inlined_call_operand.vmem [shape: s32[4,8,1], index: 0, kind: input, shape index: {}]
  %s1 = inlined_call_operand.vmem [shape: f32[4,8,128], index: 1, kind: input, shape index: {}]
  %s2 = inlined_call_operand.hbm [shape: f32[4,128,128], index: 2, kind: input, shape index: {}, may-alias: {2,4}]
  %s3 = inlined_call_operand.hbm [shape: f32[4,1,128], index: 3, kind: input, shape index: {}, may-alias: {3,5}]
  %s4 = inlined_call_operand.hbm [shape: f32[4,128,128], index: 4, kind: output, shape index: {0}, may-alias: {2,4}]
  %s5 = inlined_call_operand.hbm [shape: f32[4,1,128], index: 5, kind: output, shape index: {1}, may-alias: {3,5}]
  %s6 = inlined_call_operand.hbm [shape: f32[4,8,128], index: 6, kind: output, shape index: {2}]
  %7 = xla_tuple %s4, %s5, %s6
  %s8 = sld [smem:[#allocation0]]
  $region73: #{tpu_custom_call.1} parent=0
    _
  %s10 = ssub.s32 1, %s8
  %s11 = scalar_select 0, %s10, %s8
  $region1: #{tpu_custom_call.1} parent=0
    #allocation2 [shape = 'u8[262144]{0}', space=vmem, size = 0x40000, scoped, tag = 'input window, operand 2']
    #allocation3 [shape = 's32[2]{0}', space=sflag, size = 0x8, scoped, tag = 'scoped memory for tpu_custom_call.1']
    #allocation4 [shape = 's32[2]{0}', space=sflag, size = 0x8, scoped, tag = 'scoped memory for tpu_custom_call.1']
    #allocation5 [shape = 'u8[2048]{0}', space=vmem, size = 0x800, scoped, tag = 'input window, operand 3']
    #allocation6 [shape = 's32[2]{0}', space=sflag, size = 0x8, scoped, tag = 'scoped memory for tpu_custom_call.1']
    #allocation7 [shape = 'u8[262144]{0}', space=vmem, size = 0x40000, scoped, tag = 'output window, operand 0']
    #allocation8 [shape = 'u8[2048]{0}', space=vmem, size = 0x800, scoped, tag = 'output window, operand 1']
    #allocation9 [shape = 's32[2]{0}', space=sflag, size = 0x8, scoped, tag = 'scoped memory for tpu_custom_call.1']
    #allocation10 [shape = 'u8[16384]{0}', space=vmem, size = 0x4000, scoped, tag = 'output window, operand 2']
    %12 = vsyncpa [#allocation3], 0
    %s13 = scalar_lea.sflag [#allocation3], 1
    %14 = vsyncpa %s13, 0
    %15 = vsyncpa [#allocation6], 0
    %s16 = scalar_lea.sflag [#allocation6], 1
    %17 = vsyncpa %s16, 0
    %18 = vsyncpa [#allocation4], 0
    %s19 = scalar_lea.sflag [#allocation4], 1
    %20 = vsyncpa %s19, 0
    %21 = vsyncpa [#allocation9], 0
    %s22 = scalar_lea.sflag [#allocation9], 1
    %23 = vsyncpa %s22, 0
    loop: start=0, step=1, limit=4
    $region2: #{tpu_custom_call.1} parent=1 // loop_pre_header
      _
    $region3: #{tpu_custom_call.1} parent=1 // loop_header
      %s25 = sphi 0, %s29
      %p26 = scmp.ge.s32.totalorder %s25, 4
      %s35 = sphi 0, %s37
      %s38 = sphi 0, %s35
      %s39 = sphi 0, %s38
      %s55 = sphi 0, %s39
      %s61 = sphi 0, %s63
      %s64 = sphi 0, %s61
      %s65 = sphi 0, %s64
      %s81 = sphi 0, %s65
      %s87 = sphi 0, %s89
      %s90 = sphi 0, %s87
      %s91 = sphi 0, %s90
      %s107 = sphi 0, %s91
      %s113 = sphi 0, %s115
      %s116 = sphi 0, %s113
      %s117 = sphi 0, %s116
      %s133 = sphi 0, %s117
      %s139 = sphi 0, %s141
      %s142 = sphi 0, %s139
      %s143 = sphi 0, %s142
      %s159 = sphi 0, %s143
      %s165 = sphi 0, %s167
      %s168 = sphi 0, %s165
      %s169 = sphi 0, %s168
      %s185 = sphi 0, %s169
      %s191 = sphi 0, %s193
      %s194 = sphi 0, %s191
      %s195 = sphi 0, %s194
      %s211 = sphi 0, %s195
    $region4: #{tpu_custom_call.1} parent=1 // loop_header_branch
      %28 = sbr.rel (%p26) target = $region8
    $region5: #{tpu_custom_call.1} parent=1 // loop_body
      %s30 = ssub.s32 %s25, 1
      %s31 = ssub.s32 %s25, 2
      %s32 = sadd.s32 %s25, 1
      %s33 = ssub.s32 %s25, %s32
      %p34 = scmp.eq.s32.totalorder %s33, 0
      %s36 = sadd.s32 %s35, 1
      %s37 = scalar_select %p34, %s35, %s36
      %p40 = pneg %p34
      %p41 = scmp.eq.s32.totalorder %s25, 1
      %p42 = por %p40, %p41
      %p43 = scmp.ne.s32.totalorder %s35, %s38
      %p44 = scmp.eq.s32.totalorder %s25, 0
      %p45 = por %p43, %p44
      %p46 = scmp.ne.s32.totalorder %s35, %s38
      %p47 = scmp.eq.s32.totalorder %s30, 1
      %p48 = por %p46, %p47
      %p49 = scmp.ne.s32.totalorder %s38, %s39
      %p50 = scmp.eq.s32.totalorder %s30, 0
      %p51 = por %p49, %p50
      %p52 = scmp.ne.s32.totalorder %s38, %s39
      %p53 = scmp.eq.s32.totalorder %s31, 1
      %p54 = por %p52, %p53
      %p56 = scmp.ne.s32.totalorder %s39, %s55
      %p57 = scmp.eq.s32.totalorder %s31, 0
      %p58 = por %p56, %p57
      %s59 = ssub.s32 %s25, %s32
      %p60 = scmp.eq.s32.totalorder %s59, 0
      %s62 = sadd.s32 %s61, 1
      %s63 = scalar_select %p60, %s61, %s62
      %p66 = pneg %p60
      %p67 = scmp.eq.s32.totalorder %s25, 1
      %p68 = por %p66, %p67
      %p69 = scmp.ne.s32.totalorder %s61, %s64
      %p70 = scmp.eq.s32.totalorder %s25, 0
      %p71 = por %p69, %p70
      %p72 = scmp.ne.s32.totalorder %s61, %s64
      %p73 = scmp.eq.s32.totalorder %s30, 1
      %p74 = por %p72, %p73
      %p75 = scmp.ne.s32.totalorder %s64, %s65
      %p76 = scmp.eq.s32.totalorder %s30, 0
      %p77 = por %p75, %p76
      %p78 = scmp.ne.s32.totalorder %s64, %s65
      %p79 = scmp.eq.s32.totalorder %s31, 1
      %p80 = por %p78, %p79
      %p82 = scmp.ne.s32.totalorder %s65, %s81
      %p83 = scmp.eq.s32.totalorder %s31, 0
      %p84 = por %p82, %p83
      %s85 = ssub.s32 %s25, %s32
      %p86 = scmp.eq.s32.totalorder %s85, 0
      %s88 = sadd.s32 %s87, 1
      %s89 = scalar_select %p86, %s87, %s88
      %p92 = pneg %p86
      %p93 = scmp.eq.s32.totalorder %s25, 1
      %p94 = por %p92, %p93
      %p95 = scmp.ne.s32.totalorder %s87, %s90
      %p96 = scmp.eq.s32.totalorder %s25, 0
      %p97 = por %p95, %p96
      %p98 = scmp.ne.s32.totalorder %s87, %s90
      %p99 = scmp.eq.s32.totalorder %s30, 1
      %p100 = por %p98, %p99
      %p101 = scmp.ne.s32.totalorder %s90, %s91
      %p102 = scmp.eq.s32.totalorder %s30, 0
      %p103 = por %p101, %p102
      %p104 = scmp.ne.s32.totalorder %s90, %s91
      %p105 = scmp.eq.s32.totalorder %s31, 1
      %p106 = por %p104, %p105
      %p108 = scmp.ne.s32.totalorder %s91, %s107
      %p109 = scmp.eq.s32.totalorder %s31, 0
      %p110 = por %p108, %p109
      %s111 = ssub.s32 %s25, %s32
      %p112 = scmp.eq.s32.totalorder %s111, 0
      %s114 = sadd.s32 %s113, 1
      %s115 = scalar_select %p112, %s113, %s114
      %p118 = pneg %p112
      %p119 = scmp.eq.s32.totalorder %s25, 1
      %p120 = por %p118, %p119
      %p121 = scmp.ne.s32.totalorder %s113, %s116
      %p122 = scmp.eq.s32.totalorder %s25, 0
      %p123 = por %p121, %p122
      %p124 = scmp.ne.s32.totalorder %s113, %s116
      %p125 = scmp.eq.s32.totalorder %s30, 1
      %p126 = por %p124, %p125
      %p127 = scmp.ne.s32.totalorder %s116, %s117
      %p128 = scmp.eq.s32.totalorder %s30, 0
      %p129 = por %p127, %p128
      %p130 = scmp.ne.s32.totalorder %s116, %s117
      %p131 = scmp.eq.s32.totalorder %s31, 1
      %p132 = por %p130, %p131
      %p134 = scmp.ne.s32.totalorder %s117, %s133
      %p135 = scmp.eq.s32.totalorder %s31, 0
      %p136 = por %p134, %p135
      %s137 = ssub.s32 %s25, %s32
      %p138 = scmp.eq.s32.totalorder %s137, 0
      %s140 = sadd.s32 %s139, 1
      %s141 = scalar_select %p138, %s139, %s140
      %p144 = pneg %p138
      %p145 = scmp.eq.s32.totalorder %s25, 1
      %p146 = por %p144, %p145
      %p147 = scmp.ne.s32.totalorder %s139, %s142
      %p148 = scmp.eq.s32.totalorder %s25, 0
      %p149 = por %p147, %p148
      %p150 = scmp.ne.s32.totalorder %s139, %s142
      %p151 = scmp.eq.s32.totalorder %s30, 1
      %p152 = por %p150, %p151
      %p153 = scmp.ne.s32.totalorder %s142, %s143
      %p154 = scmp.eq.s32.totalorder %s30, 0
      %p155 = por %p153, %p154
      %p156 = scmp.ne.s32.totalorder %s142, %s143
      %p157 = scmp.eq.s32.totalorder %s31, 1
      %p158 = por %p156, %p157
      %p160 = scmp.ne.s32.totalorder %s143, %s159
      %p161 = scmp.eq.s32.totalorder %s31, 0
      %p162 = por %p160, %p161
      %s163 = ssub.s32 %s25, %s32
      %p164 = scmp.eq.s32.totalorder %s163, 0
      %s166 = sadd.s32 %s165, 1
      %s167 = scalar_select %p164, %s165, %s166
      %p170 = pneg %p164
      %p171 = scmp.eq.s32.totalorder %s25, 1
      %p172 = por %p170, %p171
      %p173 = scmp.ne.s32.totalorder %s165, %s168
      %p174 = scmp.eq.s32.totalorder %s25, 0
      %p175 = por %p173, %p174
      %p176 = scmp.ne.s32.totalorder %s165, %s168
      %p177 = scmp.eq.s32.totalorder %s30, 1
      %p178 = por %p176, %p177
      %p179 = scmp.ne.s32.totalorder %s168, %s169
      %p180 = scmp.eq.s32.totalorder %s30, 0
      %p181 = por %p179, %p180
      %p182 = scmp.ne.s32.totalorder %s168, %s169
      %p183 = scmp.eq.s32.totalorder %s31, 1
      %p184 = por %p182, %p183
      %p186 = scmp.ne.s32.totalorder %s169, %s185
      %p187 = scmp.eq.s32.totalorder %s31, 0
      %p188 = por %p186, %p187
      %s189 = ssub.s32 %s25, %s32
      %p190 = scmp.eq.s32.totalorder %s189, 0
      %s192 = sadd.s32 %s191, 1
      %s193 = scalar_select %p190, %s191, %s192
      %p196 = pneg %p190
      %p197 = scmp.eq.s32.totalorder %s25, 1
      %p198 = por %p196, %p197
      %p199 = scmp.ne.s32.totalorder %s191, %s194
      %p200 = scmp.eq.s32.totalorder %s25, 0
      %p201 = por %p199, %p200
      %p202 = scmp.ne.s32.totalorder %s191, %s194
      %p203 = scmp.eq.s32.totalorder %s30, 1
      %p204 = por %p202, %p203
      %p205 = scmp.ne.s32.totalorder %s194, %s195
      %p206 = scmp.eq.s32.totalorder %s30, 0
      %p207 = por %p205, %p206
      %p208 = scmp.ne.s32.totalorder %s194, %s195
      %p209 = scmp.eq.s32.totalorder %s31, 1
      %p210 = por %p208, %p209
      %p212 = scmp.ne.s32.totalorder %s195, %s211
      %p213 = scmp.eq.s32.totalorder %s31, 0
      %p214 = por %p212, %p213
      %p215 = scmp.le.s32.totalorder 1, %s25
      %p216 = scmp.lt.s32.totalorder %s25, 3
      %p217 = pnand %p215, %p216
      %p218 = pneg %p217
      // Predicated region
      $region9: #{tpu_custom_call.1} parent=5 // pred_check
        _
      $region10: #{tpu_custom_call.1} parent=5 // pred_check_branch
        %220 = sbr.rel (%p217) target = $region12
      $region11: #{tpu_custom_call.1} parent=5 // pred_region
        %s221 = ssub.s32 %s25, 1
      $region12: #{tpu_custom_call.1} parent=5 // pred_fallthru
        _
      %p222 = scmp.lt.s32.totalorder %s25, 2
      // Predicated region
      $region13: #{tpu_custom_call.1} parent=5 // pred_check
        %p223 = pneg %p222
      $region14: #{tpu_custom_call.1} parent=5 // pred_check_branch
        %225 = sbr.rel (%p223) target = $region16
      $region15: #{tpu_custom_call.1} parent=5 // pred_region
        // Predicated region
        $region17: #{tpu_custom_call.1} parent=15 // pred_check
          %p226 = pneg %p45
        $region18: #{tpu_custom_call.1} parent=15 // pred_check_branch
          %228 = sbr.rel (%p226) target = $region20
        $region19: #{tpu_custom_call.1} parent=15 // pred_region
          %s229 = smul.u32 2, %s25
          %p230 = scmp.lt.s32.totalorder %s229, 3
          %s231 = scalar_select %p230, %s229, 3
          %s232 = smul.addr %s231, 8
          %s233 = scalar_lea.vmem %s0, %s232
          %s234 = smul.u32 2, %s25
        $region20: #{tpu_custom_call.1} parent=15 // pred_fallthru
          _
        // Predicated region
        $region21: #{tpu_custom_call.1} parent=15 // pred_check
          %p235 = pneg %p71
        $region22: #{tpu_custom_call.1} parent=15 // pred_check_branch
          %237 = sbr.rel (%p235) target = $region24
        $region23: #{tpu_custom_call.1} parent=15 // pred_region
          %s238 = smul.u32 2, %s25
          %p239 = scmp.lt.s32.totalorder %s238, 3
          %s240 = scalar_select %p239, %s238, 3
          %s241 = smul.addr %s240, 8
          %s242 = scalar_lea.vmem %s1, %s241
          %s243 = smul.u32 2, %s25
        $region24: #{tpu_custom_call.1} parent=15 // pred_fallthru
          _
        // Predicated region
        $region25: #{tpu_custom_call.1} parent=15 // pred_check
          %p244 = pneg %p97
        $region26: #{tpu_custom_call.1} parent=15 // pred_check_branch
          %246 = sbr.rel (%p244) target = $region28
        $region27: #{tpu_custom_call.1} parent=15 // pred_region
          %s247 = sand.u32 %s87, 1
          %s248 = scalar_lea.sflag [#allocation3], %s247
          %s249 = sand.u32 %s87, 1
          %s250 = smul.addr %s249, 256
          %s251 = scalar_lea.vmem [#allocation2], %s250
          %s252 = smul.u32 2, %s25
          %254 = vsyncadd %s248, 0
          %s255 = smul.addr %s252, 16
          %s256 = smul.addr %s255, 8
          %s257 = scalar_lea.hbm %s2, %s256
          %s258 = sshll.u32 %s257, 4
          %s259 = int_to_ptr.hbm [resolvable:$true] %s258
          %s260 = sshll.u32 %s251, 4
          %s261 = int_to_ptr.vmem [resolvable:$true] %s260
          %266 = dma.hbm_to_vmem [thread:$0]  %s259, 4096, %s261, %s248, 128, 128, 8
        $region28: #{tpu_custom_call.1} parent=15 // pred_fallthru
          _
        // Predicated region
        $region29: #{tpu_custom_call.1} parent=15 // pred_check
          %p267 = pneg %p123
        $region30: #{tpu_custom_call.1} parent=15 // pred_check_branch
          %269 = sbr.rel (%p267) target = $region32
        $region31: #{tpu_custom_call.1} parent=15 // pred_region
          %s270 = sand.u32 %s113, 1
          %s271 = scalar_lea.sflag [#allocation6], %s270
          %s272 = sand.u32 %s113, 1
          %s273 = smul.addr %s272, 2
          %s274 = scalar_lea.vmem [#allocation5], %s273
          %s275 = smul.u32 2, %s25
          %277 = vsyncadd %s271, 0
          %s278 = scalar_lea.hbm %s3, %s275
          %s279 = sshll.u32 %s278, 4
          %s280 = int_to_ptr.hbm [resolvable:$true] %s279
          %s281 = sshll.u32 %s274, 4
          %s282 = int_to_ptr.vmem [resolvable:$true] %s281
          %287 = dma.hbm_to_vmem [thread:$0]  %s280, 32, %s282, %s271, 16, 16, 1
        $region32: #{tpu_custom_call.1} parent=15 // pred_fallthru
          _
      $region16: #{tpu_custom_call.1} parent=5 // pred_fallthru
        _
      %p288 = scmp.le.s32.totalorder 1, %s25
      %p289 = scmp.lt.s32.totalorder %s25, 3
      %p290 = pnand %p288, %p289
      %p291 = pneg %p290
      // Predicated region
      $region33: #{tpu_custom_call.1} parent=5 // pred_check
        _
      $region34: #{tpu_custom_call.1} parent=5 // pred_check_branch
        %293 = sbr.rel (%p290) target = $region36
      $region35: #{tpu_custom_call.1} parent=5 // pred_region
        %s294 = ssub.s32 %s25, 1
        %s295 = sand.u32 %s90, 1
        %s296 = scalar_lea.sflag [#allocation3], %s295
        %s297 = sand.u32 %s90, 1
        %s298 = smul.addr %s297, 256
        %s299 = scalar_lea.vmem [#allocation2], %s298
        // Predicated region
        $region37: #{tpu_custom_call.1} parent=35 // pred_check
          %p300 = pneg %p103
        $region38: #{tpu_custom_call.1} parent=35 // pred_check_branch
          %302 = sbr.rel (%p300) target = $region40
        $region39: #{tpu_custom_call.1} parent=35 // pred_region
          %304 = dma.done %s296, 4096
        $region40: #{tpu_custom_call.1} parent=35 // pred_fallthru
          _
        %s305 = sand.u32 %s116, 1
        %s306 = scalar_lea.sflag [#allocation6], %s305
        %s307 = sand.u32 %s116, 1
        %s308 = smul.addr %s307, 2
        %s309 = scalar_lea.vmem [#allocation5], %s308
        // Predicated region
        $region41: #{tpu_custom_call.1} parent=35 // pred_check
          %p310 = pneg %p129
        $region42: #{tpu_custom_call.1} parent=35 // pred_check_branch
          %312 = sbr.rel (%p310) target = $region44
        $region43: #{tpu_custom_call.1} parent=35 // pred_region
          %314 = dma.done %s306, 32
        $region44: #{tpu_custom_call.1} parent=35 // pred_fallthru
          _
        %s315 = smul.u32 2, %s30
        %p316 = scmp.lt.s32.totalorder %s315, 3
        %s317 = scalar_select %p316, %s315, 3
        %s318 = smul.addr %s317, 8
        %s319 = scalar_lea.vmem %s0, %s318
        %p320 = pneg %p51
        %p321 = pneg %p48
        %s322 = smul.u32 2, %s30
        %p323 = scmp.lt.s32.totalorder %s322, 3
        %s324 = scalar_select %p323, %s322, 3
        %s325 = smul.addr %s324, 8
        %s326 = scalar_lea.vmem %s1, %s325
        %p327 = pneg %p77
        %p328 = pneg %p74
        %s329 = sand.u32 %s90, 1
        %s330 = scalar_lea.sflag [#allocation3], %s329
        %s331 = sand.u32 %s90, 1
        %s332 = smul.addr %s331, 256
        %s333 = scalar_lea.vmem [#allocation2], %s332
        %p334 = pneg %p103
        %p335 = pneg %p100
        %s336 = sand.u32 %s116, 1
        %s337 = scalar_lea.sflag [#allocation6], %s336
        %s338 = sand.u32 %s116, 1
        %s339 = smul.addr %s338, 2
        %s340 = scalar_lea.vmem [#allocation5], %s339
        %p341 = pneg %p129
        %p342 = pneg %p126
        %p343 = pneg %p155
        %p344 = pneg %p152
        %s345 = sand.u32 %s142, 1
        %s346 = scalar_lea.sflag [#allocation4], %s345
        %s347 = sand.u32 %s142, 1
        %s348 = smul.addr %s347, 256
        %s349 = scalar_lea.vmem [#allocation7], %s348
        %p350 = pneg %p181
        %p351 = pneg %p178
        %s352 = sand.u32 %s30, 1
        %s353 = scalar_lea.sflag [#allocation9], %s352
        %s354 = sand.u32 %s168, 1
        %s355 = smul.addr %s354, 2
        %s356 = scalar_lea.vmem [#allocation8], %s355
        %p357 = pneg %p207
        %p358 = pneg %p204
        %s359 = sand.u32 %s30, 1
        %s360 = scalar_lea.sflag [#allocation9], %s359
        %s361 = sand.u32 %s194, 1
        %s362 = smul.addr %s361, 16
        %s363 = scalar_lea.vmem [#allocation10], %s362
        %s364 = smul.u32 2, %s30
        %p365 = scmp.lt.s32.totalorder %s364, 3
        %s366 = scalar_select %p365, %s364, 3
        %s367 = smul.addr %s366, 8
        %s368 = scalar_lea.vmem %s0, %s367
        %s369 = smul.u32 2, %s30
        %s370 = smul.u32 2, %s30
        %p371 = scmp.lt.s32.totalorder %s370, 3
        %s372 = scalar_select %p371, %s370, 3
        %s373 = smul.addr %s372, 8
        %s374 = scalar_lea.vmem %s1, %s373
        %s375 = smul.u32 2, %s30
        %s376 = smul.u32 2, %s30
        %s377 = smul.u32 2, %s30
        %s378 = smul.u32 2, %s30
        %s379 = smul.u32 2, %s30
        %s380 = smul.u32 2, %s30
        %v381 = vlaneseq
        %v382 = vand.u32 %v381, 127
        %v383 = vld [vmem:[%s368] sm:$0xff]
        %384 = vset.pattern.permute.xlu0 0
        %385 = vperm.xlu0 %384, %v383
        %v386 = vpop.permute.xlu0 %385
        %vm387 = vcmp.eq.s32.totalorder %v386, %v382
        %v388 = vsel %vm387, 1, 0
        %v389 = vcvt.s32.f32 %v388
        %v390 = vld [vmem:[%s299] sm:$0xff]
        %v391 = vld [vmem:[%s299 + $0x8] sm:$0xff]
        %v392 = vld [vmem:[%s299 + $0x10] sm:$0xff]
        %v393 = vld [vmem:[%s299 + $0x18] sm:$0xff]
        %v394 = vld [vmem:[%s299 + $0x20] sm:$0xff]
        %v395 = vld [vmem:[%s299 + $0x28] sm:$0xff]
        %v396 = vld [vmem:[%s299 + $0x30] sm:$0xff]
        %v397 = vld [vmem:[%s299 + $0x38] sm:$0xff]
        %v398 = vld [vmem:[%s299 + $0x40] sm:$0xff]
        %v399 = vld [vmem:[%s299 + $0x48] sm:$0xff]
        %v400 = vld [vmem:[%s299 + $0x50] sm:$0xff]
        %v401 = vld [vmem:[%s299 + $0x58] sm:$0xff]
        %v402 = vld [vmem:[%s299 + $0x60] sm:$0xff]
        %v403 = vld [vmem:[%s299 + $0x68] sm:$0xff]
        %v404 = vld [vmem:[%s299 + $0x70] sm:$0xff]
        %v405 = vld [vmem:[%s299 + $0x78] sm:$0xff]
        %v406 = vld [vmem:[%s309] sm:$0x1]
        %v407 = vld [vmem:[%s374] sm:$0xff]
        %v409 = vperm.slane %v406, 0
        %411 = vmatpush.msra.mxu0 %v405
        %412 = vmatpush.msra.mxu0 %v404
        %413 = vmatpush.msra.mxu0 %v403
        %414 = vmatpush.msra.mxu0 %v402
        %415 = vmatpush.msra.mxu0 %v401
        %416 = vmatpush.msra.mxu0 %v400
        %417 = vmatpush.msra.mxu0 %v399
        %418 = vmatpush.msra.mxu0 %v398
        %419 = vmatpush.msra.mxu0 %v397
        %420 = vmatpush.msra.mxu0 %v396
        %421 = vmatpush.msra.mxu0 %v395
        %422 = vmatpush.msra.mxu0 %v394
        %423 = vmatpush.msra.mxu0 %v393
        %424 = vmatpush.msra.mxu0 %v392
        %425 = vmatpush.msra.mxu0 %v391
        %426 = vmatpush.msra.mxu0 %v390
        %427 = vmatmul.f32.gmra.mxu0 %v407
        %v428 = vpop.f32.mrf.mxu0
        %v429 = vadd.f32 %v409, %v428
        %430 = vdwg.mxu0
        %431 = vmax.xlane.f32.xlu0 %v429
        %v432 = vpop.xlane.xlu0 %431
        %v433 = vsub.f32 %v429, %v432
        %v434 = vmul.f32 %v433, 1.442695
        %v435 = vpow.pop %v434
        %436 = vadd.xlane.f32.xlu0 %v435
        %v437 = vpop.xlane.xlu0 %436
        %v438 = vrcp.pop %v437
        %v439 = vmul.f32 %v437, %v438
        %v440 = vsub.f32 1.0, %v439
        %v441 = vmul.f32 %v438, %v440
        %v442 = vadd.f32 %v438, %v441
        %vm443 = vweird.f32 %v437
        %vm444 = vweird.f32 %v438
        %vm445 = vmor %vm443, %vm444
        %v446 = vsel %vm445, %v438, %v442
        %v447 = vand.u32 2147483647, %v437
        %vm448 = vcmp.eq.f32.partialorder %v447, 8.507059e+37
        %v449 = vand.u32 %v437, 2147483648
        %v450 = vor.u32 1.1754944e-38, %v449
        %v451 = vsel %vm448, %v450, %v446
        %v452 = vmul.f32 %v435, %v451
        %v453 = vsub.f32 %v452, %v389
        %v454 = vmul.f32 %v453, 0.125
        %455 = vxpose.xlu0.b32.start [1/16] %v407, 128
        %456 = vxpose.xlu0.b32.cont [2/16] 0.0, 128
        %457 = vxpose.xlu0.b32.cont [3/16] 0.0, 128
        %458 = vxpose.xlu0.b32.cont [4/16] 0.0, 128
        %459 = vxpose.xlu0.b32.cont [5/16] 0.0, 128
        %460 = vxpose.xlu0.b32.cont [6/16] 0.0, 128
        %461 = vxpose.xlu0.b32.cont [7/16] 0.0, 128
        %462 = vxpose.xlu0.b32.cont [8/16] 0.0, 128
        %463 = vxpose.xlu0.b32.cont [9/16] 0.0, 128
        %464 = vxpose.xlu0.b32.cont [10/16] 0.0, 128
        %465 = vxpose.xlu0.b32.cont [11/16] 0.0, 128
        %466 = vxpose.xlu0.b32.cont [12/16] 0.0, 128
        %467 = vxpose.xlu0.b32.cont [13/16] 0.0, 128
        %468 = vxpose.xlu0.b32.cont [14/16] 0.0, 128
        %469 = vxpose.xlu0.b32.cont [15/16] 0.0, 128
        %470 = vxpose.xlu0.b32.end [16/16] 0.0, 128
        %v471 = vpop.trf.xlu0
        %v472 = vpop.trf.xlu0
        %v473 = vpop.trf.xlu0
        %v474 = vpop.trf.xlu0
        %v475 = vpop.trf.xlu0
        %v476 = vpop.trf.xlu0
        %v477 = vpop.trf.xlu0
        %v478 = vpop.trf.xlu0
        %v479 = vpop.trf.xlu0
        %v480 = vpop.trf.xlu0
        %v481 = vpop.trf.xlu0
        %v482 = vpop.trf.xlu0
        %v483 = vpop.trf.xlu0
        %v484 = vpop.trf.xlu0
        %v485 = vpop.trf.xlu0
        %v486 = vpop.trf.xlu0
        %vm487 = vcmask 64512
        %v489 = vsel %vm487, %v471, 0
        %v492 = vsel %vm487, %v472, 0
        %v495 = vsel %vm487, %v473, 0
        %v498 = vsel %vm487, %v474, 0
        %v501 = vsel %vm487, %v475, 0
        %v504 = vsel %vm487, %v476, 0
        %v507 = vsel %vm487, %v477, 0
        %v510 = vsel %vm487, %v478, 0
        %v513 = vsel %vm487, %v479, 0
        %v516 = vsel %vm487, %v480, 0
        %v519 = vsel %vm487, %v481, 0
        %v522 = vsel %vm487, %v482, 0
        %v525 = vsel %vm487, %v483, 0
        %v528 = vsel %vm487, %v484, 0
        %v531 = vsel %vm487, %v485, 0
        %v534 = vsel %vm487, %v486, 0
        %536 = vmatpush.msra.mxu0 0.0
        %537 = vmatpush.msra.mxu0 0.0
        %538 = vmatpush.msra.mxu0 0.0
        %539 = vmatpush.msra.mxu0 0.0
        %540 = vmatpush.msra.mxu0 0.0
        %541 = vmatpush.msra.mxu0 0.0
        %542 = vmatpush.msra.mxu0 0.0
        %543 = vmatpush.msra.mxu0 0.0
        %544 = vmatpush.msra.mxu0 0.0
        %545 = vmatpush.msra.mxu0 0.0
        %546 = vmatpush.msra.mxu0 0.0
        %547 = vmatpush.msra.mxu0 0.0
        %548 = vmatpush.msra.mxu0 0.0
        %549 = vmatpush.msra.mxu0 0.0
        %550 = vmatpush.msra.mxu0 0.0
        %551 = vmatpush.msra.mxu0 %v454
        %552 = vmatmul.f32.gmra.mxu0 %v489
        %v553 = vpop.f32.mrf.mxu0
        %v554 = vadd.f32 0.0, %v553
        %555 = vmatmul.f32.gmra.mxu0 %v492
        %v556 = vpop.f32.mrf.mxu0
        %v557 = vadd.f32 0.0, %v556
        %558 = vmatmul.f32.gmra.mxu0 %v495
        %v559 = vpop.f32.mrf.mxu0
        %v560 = vadd.f32 0.0, %v559
        %561 = vmatmul.f32.gmra.mxu0 %v498
        %v562 = vpop.f32.mrf.mxu0
        %v563 = vadd.f32 0.0, %v562
        %564 = vmatmul.f32.gmra.mxu0 %v501
        %v565 = vpop.f32.mrf.mxu0
        %v566 = vadd.f32 0.0, %v565
        %567 = vmatmul.f32.gmra.mxu0 %v504
        %v568 = vpop.f32.mrf.mxu0
        %v569 = vadd.f32 0.0, %v568
        %570 = vmatmul.f32.gmra.mxu0 %v507
        %v571 = vpop.f32.mrf.mxu0
        %v572 = vadd.f32 0.0, %v571
        %573 = vmatmul.f32.gmra.mxu0 %v510
        %v574 = vpop.f32.mrf.mxu0
        %v575 = vadd.f32 0.0, %v574
        %576 = vmatmul.f32.gmra.mxu0 %v513
        %v577 = vpop.f32.mrf.mxu0
        %v578 = vadd.f32 0.0, %v577
        %579 = vmatmul.f32.gmra.mxu0 %v516
        %v580 = vpop.f32.mrf.mxu0
        %v581 = vadd.f32 0.0, %v580
        %582 = vmatmul.f32.gmra.mxu0 %v519
        %v583 = vpop.f32.mrf.mxu0
        %v584 = vadd.f32 0.0, %v583
        %585 = vmatmul.f32.gmra.mxu0 %v522
        %v586 = vpop.f32.mrf.mxu0
        %v587 = vadd.f32 0.0, %v586
        %588 = vmatmul.f32.gmra.mxu0 %v525
        %v589 = vpop.f32.mrf.mxu0
        %v590 = vadd.f32 0.0, %v589
        %591 = vmatmul.f32.gmra.mxu0 %v528
        %v592 = vpop.f32.mrf.mxu0
        %v593 = vadd.f32 0.0, %v592
        %594 = vmatmul.f32.gmra.mxu0 %v531
        %v595 = vpop.f32.mrf.mxu0
        %v596 = vadd.f32 0.0, %v595
        %597 = vmatmul.f32.gmra.mxu0 %v534
        %v598 = vpop.f32.mrf.mxu0
        %v599 = vadd.f32 0.0, %v598
        %600 = vdwg.mxu0
        %v601 = vrot.slane %v454, 4
        %v602 = vadd.f32 %v454, %v601
        %v603 = vrot.slane %v602, 2
        %v604 = vadd.f32 %v602, %v603
        %v605 = vrot.slane %v604, 1
        %v606 = vadd.f32 %v604, %v605
        %v607 = vmul.f32 %v554, 0.1
        %v608 = vmul.f32 %v557, 0.1
        %v609 = vmul.f32 %v560, 0.1
        %v610 = vmul.f32 %v563, 0.1
        %v611 = vmul.f32 %v566, 0.1
        %v612 = vmul.f32 %v569, 0.1
        %v613 = vmul.f32 %v572, 0.1
        %v614 = vmul.f32 %v575, 0.1
        %v615 = vmul.f32 %v578, 0.1
        %v616 = vmul.f32 %v581, 0.1
        %v617 = vmul.f32 %v584, 0.1
        %v618 = vmul.f32 %v587, 0.1
        %v619 = vmul.f32 %v590, 0.1
        %v620 = vmul.f32 %v593, 0.1
        %v621 = vmul.f32 %v596, 0.1
        %v622 = vmul.f32 %v599, 0.1
        %v623 = vsub.f32 %v390, %v607
        %v624 = vsub.f32 %v391, %v608
        %v625 = vsub.f32 %v392, %v609
        %v626 = vsub.f32 %v393, %v610
        %v627 = vsub.f32 %v394, %v611
        %v628 = vsub.f32 %v395, %v612
        %v629 = vsub.f32 %v396, %v613
        %v630 = vsub.f32 %v397, %v614
        %v631 = vsub.f32 %v398, %v615
        %v632 = vsub.f32 %v399, %v616
        %v633 = vsub.f32 %v400, %v617
        %v634 = vsub.f32 %v401, %v618
        %v635 = vsub.f32 %v402, %v619
        %v636 = vsub.f32 %v403, %v620
        %v637 = vsub.f32 %v404, %v621
        %v638 = vsub.f32 %v405, %v622
        %v639 = vmul.f32 %v606, 0.1
        %v640 = vsub.f32 %v406, %v639
        %v642 = vperm.slane %v640, 0
        %644 = vmatpush.msra.mxu0 %v638
        %645 = vmatpush.msra.mxu0 %v637
        %646 = vmatpush.msra.mxu0 %v636
        %647 = vmatpush.msra.mxu0 %v635
        %648 = vmatpush.msra.mxu0 %v634
        %649 = vmatpush.msra.mxu0 %v633
        %650 = vmatpush.msra.mxu0 %v632
        %651 = vmatpush.msra.mxu0 %v631
        %652 = vmatpush.msra.mxu0 %v630
        %653 = vmatpush.msra.mxu0 %v629
        %654 = vmatpush.msra.mxu0 %v628
        %655 = vmatpush.msra.mxu0 %v627
        %656 = vmatpush.msra.mxu0 %v626
        %657 = vmatpush.msra.mxu0 %v625
        %658 = vmatpush.msra.mxu0 %v624
        %659 = vmatpush.msra.mxu0 %v623
        %660 = vmatmul.f32.gmra.mxu0 %v407
        %v661 = vpop.f32.mrf.mxu0
        %v662 = vadd.f32 %v642, %v661
        %663 = vdwg.mxu0
        %664 = vmax.xlane.f32.xlu0 %v662
        %v665 = vpop.xlane.xlu0 %664
        %v666 = vsub.f32 %v662, %v665
        %v667 = vmul.f32 %v666, 1.442695
        %v668 = vpow.pop %v667
        %669 = vadd.xlane.f32.xlu0 %v668
        %v670 = vpop.xlane.xlu0 %669
        %v671 = vrcp.pop %v670
        %v672 = vmul.f32 %v670, %v671
        %v673 = vsub.f32 1.0, %v672
        %v674 = vmul.f32 %v671, %v673
        %v675 = vadd.f32 %v671, %v674
        %vm676 = vweird.f32 %v670
        %vm677 = vweird.f32 %v671
        %vm678 = vmor %vm676, %vm677
        %v679 = vsel %vm678, %v671, %v675
        %v680 = vand.u32 2147483647, %v670
        %vm681 = vcmp.eq.f32.partialorder %v680, 8.507059e+37
        %v682 = vand.u32 %v670, 2147483648
        %v683 = vor.u32 1.1754944e-38, %v682
        %v684 = vsel %vm681, %v683, %v679
        %v685 = vmul.f32 %v668, %v684
        %v686 = vsub.f32 %v685, %v389
        %v687 = vmul.f32 %v686, 0.125
        %688 = vmatpush.msra.mxu0 0.0
        %689 = vmatpush.msra.mxu0 0.0
        %690 = vmatpush.msra.mxu0 0.0
        %691 = vmatpush.msra.mxu0 0.0
        %692 = vmatpush.msra.mxu0 0.0
        %693 = vmatpush.msra.mxu0 0.0
        %694 = vmatpush.msra.mxu0 0.0
        %695 = vmatpush.msra.mxu0 0.0
        %696 = vmatpush.msra.mxu0 0.0
        %697 = vmatpush.msra.mxu0 0.0
        %698 = vmatpush.msra.mxu0 0.0
        %699 = vmatpush.msra.mxu0 0.0
        %700 = vmatpush.msra.mxu0 0.0
        %701 = vmatpush.msra.mxu0 0.0
        %702 = vmatpush.msra.mxu0 0.0
        %703 = vmatpush.msra.mxu0 %v687
        %704 = vmatmul.f32.gmra.mxu0 %v489
        %v705 = vpop.f32.mrf.mxu0
        %v706 = vadd.f32 0.0, %v705
        %707 = vmatmul.f32.gmra.mxu0 %v492
        %v708 = vpop.f32.mrf.mxu0
        %v709 = vadd.f32 0.0, %v708
        %710 = vmatmul.f32.gmra.mxu0 %v495
        %v711 = vpop.f32.mrf.mxu0
        %v712 = vadd.f32 0.0, %v711
        %713 = vmatmul.f32.gmra.mxu0 %v498
        %v714 = vpop.f32.mrf.mxu0
        %v715 = vadd.f32 0.0, %v714
        %716 = vmatmul.f32.gmra.mxu0 %v501
        %v717 = vpop.f32.mrf.mxu0
        %v718 = vadd.f32 0.0, %v717
        %719 = vmatmul.f32.gmra.mxu0 %v504
        %v720 = vpop.f32.mrf.mxu0
        %v721 = vadd.f32 0.0, %v720
        %722 = vmatmul.f32.gmra.mxu0 %v507
        %v723 = vpop.f32.mrf.mxu0
        %v724 = vadd.f32 0.0, %v723
        %725 = vmatmul.f32.gmra.mxu0 %v510
        %v726 = vpop.f32.mrf.mxu0
        %v727 = vadd.f32 0.0, %v726
        %728 = vmatmul.f32.gmra.mxu0 %v513
        %v729 = vpop.f32.mrf.mxu0
        %v730 = vadd.f32 0.0, %v729
        %731 = vmatmul.f32.gmra.mxu0 %v516
        %v732 = vpop.f32.mrf.mxu0
        %v733 = vadd.f32 0.0, %v732
        %734 = vmatmul.f32.gmra.mxu0 %v519
        %v735 = vpop.f32.mrf.mxu0
        %v736 = vadd.f32 0.0, %v735
        %737 = vmatmul.f32.gmra.mxu0 %v522
        %v738 = vpop.f32.mrf.mxu0
        %v739 = vadd.f32 0.0, %v738
        %740 = vmatmul.f32.gmra.mxu0 %v525
        %v741 = vpop.f32.mrf.mxu0
        %v742 = vadd.f32 0.0, %v741
        %743 = vmatmul.f32.gmra.mxu0 %v528
        %v744 = vpop.f32.mrf.mxu0
        %v745 = vadd.f32 0.0, %v744
        %746 = vmatmul.f32.gmra.mxu0 %v531
        %v747 = vpop.f32.mrf.mxu0
        %v748 = vadd.f32 0.0, %v747
        %749 = vmatmul.f32.gmra.mxu0 %v534
        %v750 = vpop.f32.mrf.mxu0
        %v751 = vadd.f32 0.0, %v750
        %752 = vdwg.mxu0
        %v753 = vrot.slane %v687, 4
        %v754 = vadd.f32 %v687, %v753
        %v755 = vrot.slane %v754, 2
        %v756 = vadd.f32 %v754, %v755
        %v757 = vrot.slane %v756, 1
        %v758 = vadd.f32 %v756, %v757
        %v759 = vmul.f32 %v706, 0.1
        %v760 = vmul.f32 %v709, 0.1
        %v761 = vmul.f32 %v712, 0.1
        %v762 = vmul.f32 %v715, 0.1
        %v763 = vmul.f32 %v718, 0.1
        %v764 = vmul.f32 %v721, 0.1
        %v765 = vmul.f32 %v724, 0.1
        %v766 = vmul.f32 %v727, 0.1
        %v767 = vmul.f32 %v730, 0.1
        %v768 = vmul.f32 %v733, 0.1
        %v769 = vmul.f32 %v736, 0.1
        %v770 = vmul.f32 %v739, 0.1
        %v771 = vmul.f32 %v742, 0.1
        %v772 = vmul.f32 %v745, 0.1
        %v773 = vmul.f32 %v748, 0.1
        %v774 = vmul.f32 %v751, 0.1
        %v775 = vsub.f32 %v623, %v759
        %v776 = vsub.f32 %v624, %v760
        %v777 = vsub.f32 %v625, %v761
        %v778 = vsub.f32 %v626, %v762
        %v779 = vsub.f32 %v627, %v763
        %v780 = vsub.f32 %v628, %v764
        %v781 = vsub.f32 %v629, %v765
        %v782 = vsub.f32 %v630, %v766
        %v783 = vsub.f32 %v631, %v767
        %v784 = vsub.f32 %v632, %v768
        %v785 = vsub.f32 %v633, %v769
        %v786 = vsub.f32 %v634, %v770
        %v787 = vsub.f32 %v635, %v771
        %v788 = vsub.f32 %v636, %v772
        %v789 = vsub.f32 %v637, %v773
        %v790 = vsub.f32 %v638, %v774
        %v791 = vmul.f32 %v758, 0.1
        %v792 = vsub.f32 %v640, %v791
        %v794 = vperm.slane %v792, 0
        %796 = vmatpush.msra.mxu0 %v790
        %797 = vmatpush.msra.mxu0 %v789
        %798 = vmatpush.msra.mxu0 %v788
        %799 = vmatpush.msra.mxu0 %v787
        %800 = vmatpush.msra.mxu0 %v786
        %801 = vmatpush.msra.mxu0 %v785
        %802 = vmatpush.msra.mxu0 %v784
        %803 = vmatpush.msra.mxu0 %v783
        %804 = vmatpush.msra.mxu0 %v782
        %805 = vmatpush.msra.mxu0 %v781
        %806 = vmatpush.msra.mxu0 %v780
        %807 = vmatpush.msra.mxu0 %v779
        %808 = vmatpush.msra.mxu0 %v778
        %809 = vmatpush.msra.mxu0 %v777
        %810 = vmatpush.msra.mxu0 %v776
        %811 = vmatpush.msra.mxu0 %v775
        %812 = vmatmul.f32.gmra.mxu0 %v407
        %v813 = vpop.f32.mrf.mxu0
        %v814 = vadd.f32 %v794, %v813
        %815 = vdwg.mxu0
        %816 = vmax.xlane.f32.xlu0 %v814
        %v817 = vpop.xlane.xlu0 %816
        %v818 = vsub.f32 %v814, %v817
        %v819 = vmul.f32 %v818, 1.442695
        %v820 = vpow.pop %v819
        %821 = vadd.xlane.f32.xlu0 %v820
        %v822 = vpop.xlane.xlu0 %821
        %v823 = vrcp.pop %v822
        %v824 = vmul.f32 %v822, %v823
        %v825 = vsub.f32 1.0, %v824
        %v826 = vmul.f32 %v823, %v825
        %v827 = vadd.f32 %v823, %v826
        %vm828 = vweird.f32 %v822
        %vm829 = vweird.f32 %v823
        %vm830 = vmor %vm828, %vm829
        %v831 = vsel %vm830, %v823, %v827
        %v832 = vand.u32 2147483647, %v822
        %vm833 = vcmp.eq.f32.partialorder %v832, 8.507059e+37
        %v834 = vand.u32 %v822, 2147483648
        %v835 = vor.u32 1.1754944e-38, %v834
        %v836 = vsel %vm833, %v835, %v831
        %v837 = vmul.f32 %v820, %v836
        %v838 = vsub.f32 %v837, %v389
        %v839 = vmul.f32 %v838, 0.125
        %840 = vmatpush.msra.mxu0 0.0
        %841 = vmatpush.msra.mxu0 0.0
        %842 = vmatpush.msra.mxu0 0.0
        %843 = vmatpush.msra.mxu0 0.0
        %844 = vmatpush.msra.mxu0 0.0
        %845 = vmatpush.msra.mxu0 0.0
        %846 = vmatpush.msra.mxu0 0.0
        %847 = vmatpush.msra.mxu0 0.0
        %848 = vmatpush.msra.mxu0 0.0
        %849 = vmatpush.msra.mxu0 0.0
        %850 = vmatpush.msra.mxu0 0.0
        %851 = vmatpush.msra.mxu0 0.0
        %852 = vmatpush.msra.mxu0 0.0
        %853 = vmatpush.msra.mxu0 0.0
        %854 = vmatpush.msra.mxu0 0.0
        %855 = vmatpush.msra.mxu0 %v839
        %856 = vmatmul.f32.gmra.mxu0 %v489
        %v857 = vpop.f32.mrf.mxu0
        %v858 = vadd.f32 0.0, %v857
        %859 = vmatmul.f32.gmra.mxu0 %v492
        %v860 = vpop.f32.mrf.mxu0
        %v861 = vadd.f32 0.0, %v860
        %862 = vmatmul.f32.gmra.mxu0 %v495
        %v863 = vpop.f32.mrf.mxu0
        %v864 = vadd.f32 0.0, %v863
        %865 = vmatmul.f32.gmra.mxu0 %v498
        %v866 = vpop.f32.mrf.mxu0
        %v867 = vadd.f32 0.0, %v866
        %868 = vmatmul.f32.gmra.mxu0 %v501
        %v869 = vpop.f32.mrf.mxu0
        %v870 = vadd.f32 0.0, %v869
        %871 = vmatmul.f32.gmra.mxu0 %v504
        %v872 = vpop.f32.mrf.mxu0
        %v873 = vadd.f32 0.0, %v872
        %874 = vmatmul.f32.gmra.mxu0 %v507
        %v875 = vpop.f32.mrf.mxu0
        %v876 = vadd.f32 0.0, %v875
        %877 = vmatmul.f32.gmra.mxu0 %v510
        %v878 = vpop.f32.mrf.mxu0
        %v879 = vadd.f32 0.0, %v878
        %880 = vmatmul.f32.gmra.mxu0 %v513
        %v881 = vpop.f32.mrf.mxu0
        %v882 = vadd.f32 0.0, %v881
        %883 = vmatmul.f32.gmra.mxu0 %v516
        %v884 = vpop.f32.mrf.mxu0
        %v885 = vadd.f32 0.0, %v884
        %886 = vmatmul.f32.gmra.mxu0 %v519
        %v887 = vpop.f32.mrf.mxu0
        %v888 = vadd.f32 0.0, %v887
        %889 = vmatmul.f32.gmra.mxu0 %v522
        %v890 = vpop.f32.mrf.mxu0
        %v891 = vadd.f32 0.0, %v890
        %892 = vmatmul.f32.gmra.mxu0 %v525
        %v893 = vpop.f32.mrf.mxu0
        %v894 = vadd.f32 0.0, %v893
        %895 = vmatmul.f32.gmra.mxu0 %v528
        %v896 = vpop.f32.mrf.mxu0
        %v897 = vadd.f32 0.0, %v896
        %898 = vmatmul.f32.gmra.mxu0 %v531
        %v899 = vpop.f32.mrf.mxu0
        %v900 = vadd.f32 0.0, %v899
        %901 = vmatmul.f32.gmra.mxu0 %v534
        %v902 = vpop.f32.mrf.mxu0
        %v903 = vadd.f32 0.0, %v902
        %904 = vdwg.mxu0
        %v905 = vrot.slane %v839, 4
        %v906 = vadd.f32 %v839, %v905
        %v907 = vrot.slane %v906, 2
        %v908 = vadd.f32 %v906, %v907
        %v909 = vrot.slane %v908, 1
        %v910 = vadd.f32 %v908, %v909
        %v911 = vmul.f32 %v858, 0.1
        %v912 = vmul.f32 %v861, 0.1
        %v913 = vmul.f32 %v864, 0.1
        %v914 = vmul.f32 %v867, 0.1
        %v915 = vmul.f32 %v870, 0.1
        %v916 = vmul.f32 %v873, 0.1
        %v917 = vmul.f32 %v876, 0.1
        %v918 = vmul.f32 %v879, 0.1
        %v919 = vmul.f32 %v882, 0.1
        %v920 = vmul.f32 %v885, 0.1
        %v921 = vmul.f32 %v888, 0.1
        %v922 = vmul.f32 %v891, 0.1
        %v923 = vmul.f32 %v894, 0.1
        %v924 = vmul.f32 %v897, 0.1
        %v925 = vmul.f32 %v900, 0.1
        %v926 = vmul.f32 %v903, 0.1
        %v927 = vsub.f32 %v775, %v911
        %v928 = vsub.f32 %v776, %v912
        %v929 = vsub.f32 %v777, %v913
        %v930 = vsub.f32 %v778, %v914
        %v931 = vsub.f32 %v779, %v915
        %v932 = vsub.f32 %v780, %v916
        %v933 = vsub.f32 %v781, %v917
        %v934 = vsub.f32 %v782, %v918
        %v935 = vsub.f32 %v783, %v919
        %v936 = vsub.f32 %v784, %v920
        %v937 = vsub.f32 %v785, %v921
        %v938 = vsub.f32 %v786, %v922
        %v939 = vsub.f32 %v787, %v923
        %v940 = vsub.f32 %v788, %v924
        %v941 = vsub.f32 %v789, %v925
        %v942 = vsub.f32 %v790, %v926
        %v943 = vmul.f32 %v910, 0.1
        %v944 = vsub.f32 %v792, %v943
        %945 = vst [vmem:[%s349] sm:$0xff] %v927
        %946 = vst [vmem:[%s349 + $0x8] sm:$0xff] %v928
        %947 = vst [vmem:[%s349 + $0x10] sm:$0xff] %v929
        %948 = vst [vmem:[%s349 + $0x18] sm:$0xff] %v930
        %949 = vst [vmem:[%s349 + $0x20] sm:$0xff] %v931
        %950 = vst [vmem:[%s349 + $0x28] sm:$0xff] %v932
        %951 = vst [vmem:[%s349 + $0x30] sm:$0xff] %v933
        %952 = vst [vmem:[%s349 + $0x38] sm:$0xff] %v934
        %953 = vst [vmem:[%s349 + $0x40] sm:$0xff] %v935
        %954 = vst [vmem:[%s349 + $0x48] sm:$0xff] %v936
        %955 = vst [vmem:[%s349 + $0x50] sm:$0xff] %v937
        %956 = vst [vmem:[%s349 + $0x58] sm:$0xff] %v938
        %957 = vst [vmem:[%s349 + $0x60] sm:$0xff] %v939
        %958 = vst [vmem:[%s349 + $0x68] sm:$0xff] %v940
        %959 = vst [vmem:[%s349 + $0x70] sm:$0xff] %v941
        %960 = vst [vmem:[%s349 + $0x78] sm:$0xff] %v942
        %961 = vst [vmem:[%s356] sm:$0x1] %v944
        %v962 = vld [vmem:[%s374] sm:$0xff]
        %v964 = vperm.slane %v944, 0
        %966 = vmatpush.msra.mxu0 %v942
        %967 = vmatpush.msra.mxu0 %v941
        %968 = vmatpush.msra.mxu0 %v940
        %969 = vmatpush.msra.mxu0 %v939
        %970 = vmatpush.msra.mxu0 %v938
        %971 = vmatpush.msra.mxu0 %v937
        %972 = vmatpush.msra.mxu0 %v936
        %973 = vmatpush.msra.mxu0 %v935
        %974 = vmatpush.msra.mxu0 %v934
        %975 = vmatpush.msra.mxu0 %v933
        %976 = vmatpush.msra.mxu0 %v932
        %977 = vmatpush.msra.mxu0 %v931
        %978 = vmatpush.msra.mxu0 %v930
        %979 = vmatpush.msra.mxu0 %v929
        %980 = vmatpush.msra.mxu0 %v928
        %981 = vmatpush.msra.mxu0 %v927
        %982 = vmatmul.f32.gmra.mxu0 %v962
        %v983 = vpop.f32.mrf.mxu0
        %v984 = vadd.f32 %v964, %v983
        %985 = vdwg.mxu0
        %986 = vst [vmem:[%s363] sm:$0xff] %v984
        %s987 = scalar_lea.vmem %s368, 8
        %v988 = vld [vmem:[%s987] sm:$0xff]
        %989 = vset.pattern.permute.xlu0 0
        %990 = vperm.xlu0 %989, %v988
        %v991 = vpop.permute.xlu0 %990
        %vm992 = vcmp.eq.s32.totalorder %v991, %v382
        %v993 = vsel %vm992, 1, 0
        %v994 = vcvt.s32.f32 %v993
        %s995 = scalar_lea.vmem %s299, 128 [#allocation2]
        %v996 = vld [vmem:[%s995] sm:$0xff]
        %v997 = vld [vmem:[%s995 + $0x8] sm:$0xff]
        %v998 = vld [vmem:[%s995 + $0x10] sm:$0xff]
        %v999 = vld [vmem:[%s995 + $0x18] sm:$0xff]
        %v1000 = vld [vmem:[%s995 + $0x20] sm:$0xff]
        %v1001 = vld [vmem:[%s995 + $0x28] sm:$0xff]
        %v1002 = vld [vmem:[%s995 + $0x30] sm:$0xff]
        %v1003 = vld [vmem:[%s995 + $0x38] sm:$0xff]
        %v1004 = vld [vmem:[%s995 + $0x40] sm:$0xff]
        %v1005 = vld [vmem:[%s995 + $0x48] sm:$0xff]
        %v1006 = vld [vmem:[%s995 + $0x50] sm:$0xff]
        %v1007 = vld [vmem:[%s995 + $0x58] sm:$0xff]
        %v1008 = vld [vmem:[%s995 + $0x60] sm:$0xff]
        %v1009 = vld [vmem:[%s995 + $0x68] sm:$0xff]
        %v1010 = vld [vmem:[%s995 + $0x70] sm:$0xff]
        %v1011 = vld [vmem:[%s995 + $0x78] sm:$0xff]
        %s1012 = scalar_lea.vmem %s309, 1 [#allocation5]
        %v1013 = vld [vmem:[%s1012] sm:$0x1]
        %s1014 = scalar_lea.vmem %s374, 8
        %v1015 = vld [vmem:[%s1014] sm:$0xff]
        %v1017 = vperm.slane %v1013, 0
        %1019 = vmatpush.msra.mxu0 %v1011
        %1020 = vmatpush.msra.mxu0 %v1010
        %1021 = vmatpush.msra.mxu0 %v1009
        %1022 = vmatpush.msra.mxu0 %v1008
        %1023 = vmatpush.msra.mxu0 %v1007
        %1024 = vmatpush.msra.mxu0 %v1006
        %1025 = vmatpush.msra.mxu0 %v1005
        %1026 = vmatpush.msra.mxu0 %v1004
        %1027 = vmatpush.msra.mxu0 %v1003
        %1028 = vmatpush.msra.mxu0 %v1002
        %1029 = vmatpush.msra.mxu0 %v1001
        %1030 = vmatpush.msra.mxu0 %v1000
        %1031 = vmatpush.msra.mxu0 %v999
        %1032 = vmatpush.msra.mxu0 %v998
        %1033 = vmatpush.msra.mxu0 %v997
        %1034 = vmatpush.msra.mxu0 %v996
        %1035 = vmatmul.f32.gmra.mxu0 %v1015
        %v1036 = vpop.f32.mrf.mxu0
        %v1037 = vadd.f32 %v1017, %v1036
        %1038 = vdwg.mxu0
        %1039 = vmax.xlane.f32.xlu0 %v1037
        %v1040 = vpop.xlane.xlu0 %1039
        %v1041 = vsub.f32 %v1037, %v1040
        %v1042 = vmul.f32 %v1041, 1.442695
        %v1043 = vpow.pop %v1042
        %1044 = vadd.xlane.f32.xlu0 %v1043
        %v1045 = vpop.xlane.xlu0 %1044
        %v1046 = vrcp.pop %v1045
        %v1047 = vmul.f32 %v1045, %v1046
        %v1048 = vsub.f32 1.0, %v1047
        %v1049 = vmul.f32 %v1046, %v1048
        %v1050 = vadd.f32 %v1046, %v1049
        %vm1051 = vweird.f32 %v1045
        %vm1052 = vweird.f32 %v1046
        %vm1053 = vmor %vm1051, %vm1052
        %v1054 = vsel %vm1053, %v1046, %v1050
        %v1055 = vand.u32 2147483647, %v1045
        %vm1056 = vcmp.eq.f32.partialorder %v1055, 8.507059e+37
        %v1057 = vand.u32 %v1045, 2147483648
        %v1058 = vor.u32 1.1754944e-38, %v1057
        %v1059 = vsel %vm1056, %v1058, %v1054
        %v1060 = vmul.f32 %v1043, %v1059
        %v1061 = vsub.f32 %v1060, %v994
        %v1062 = vmul.f32 %v1061, 0.125
        %1063 = vxpose.xlu0.b32.start [1/16] %v1015, 128
        %1064 = vxpose.xlu0.b32.cont [2/16] 0.0, 128
        %1065 = vxpose.xlu0.b32.cont [3/16] 0.0, 128
        %1066 = vxpose.xlu0.b32.cont [4/16] 0.0, 128
        %1067 = vxpose.xlu0.b32.cont [5/16] 0.0, 128
        %1068 = vxpose.xlu0.b32.cont [6/16] 0.0, 128
        %1069 = vxpose.xlu0.b32.cont [7/16] 0.0, 128
        %1070 = vxpose.xlu0.b32.cont [8/16] 0.0, 128
        %1071 = vxpose.xlu0.b32.cont [9/16] 0.0, 128
        %1072 = vxpose.xlu0.b32.cont [10/16] 0.0, 128
        %1073 = vxpose.xlu0.b32.cont [11/16] 0.0, 128
        %1074 = vxpose.xlu0.b32.cont [12/16] 0.0, 128
        %1075 = vxpose.xlu0.b32.cont [13/16] 0.0, 128
        %1076 = vxpose.xlu0.b32.cont [14/16] 0.0, 128
        %1077 = vxpose.xlu0.b32.cont [15/16] 0.0, 128
        %1078 = vxpose.xlu0.b32.end [16/16] 0.0, 128
        %v1079 = vpop.trf.xlu0
        %v1080 = vpop.trf.xlu0
        %v1081 = vpop.trf.xlu0
        %v1082 = vpop.trf.xlu0
        %v1083 = vpop.trf.xlu0
        %v1084 = vpop.trf.xlu0
        %v1085 = vpop.trf.xlu0
        %v1086 = vpop.trf.xlu0
        %v1087 = vpop.trf.xlu0
        %v1088 = vpop.trf.xlu0
        %v1089 = vpop.trf.xlu0
        %v1090 = vpop.trf.xlu0
        %v1091 = vpop.trf.xlu0
        %v1092 = vpop.trf.xlu0
        %v1093 = vpop.trf.xlu0
        %v1094 = vpop.trf.xlu0
        %v1096 = vsel %vm487, %v1079, 0
        %v1099 = vsel %vm487, %v1080, 0
        %v1102 = vsel %vm487, %v1081, 0
        %v1105 = vsel %vm487, %v1082, 0
        %v1108 = vsel %vm487, %v1083, 0
        %v1111 = vsel %vm487, %v1084, 0
        %v1114 = vsel %vm487, %v1085, 0
        %v1117 = vsel %vm487, %v1086, 0
        %v1120 = vsel %vm487, %v1087, 0
        %v1123 = vsel %vm487, %v1088, 0
        %v1126 = vsel %vm487, %v1089, 0
        %v1129 = vsel %vm487, %v1090, 0
        %v1132 = vsel %vm487, %v1091, 0
        %v1135 = vsel %vm487, %v1092, 0
        %v1138 = vsel %vm487, %v1093, 0
        %v1141 = vsel %vm487, %v1094, 0
        %1143 = vmatpush.msra.mxu0 0.0
        %1144 = vmatpush.msra.mxu0 0.0
        %1145 = vmatpush.msra.mxu0 0.0
        %1146 = vmatpush.msra.mxu0 0.0
        %1147 = vmatpush.msra.mxu0 0.0
        %1148 = vmatpush.msra.mxu0 0.0
        %1149 = vmatpush.msra.mxu0 0.0
        %1150 = vmatpush.msra.mxu0 0.0
        %1151 = vmatpush.msra.mxu0 0.0
        %1152 = vmatpush.msra.mxu0 0.0
        %1153 = vmatpush.msra.mxu0 0.0
        %1154 = vmatpush.msra.mxu0 0.0
        %1155 = vmatpush.msra.mxu0 0.0
        %1156 = vmatpush.msra.mxu0 0.0
        %1157 = vmatpush.msra.mxu0 0.0
        %1158 = vmatpush.msra.mxu0 %v1062
        %1159 = vmatmul.f32.gmra.mxu0 %v1096
        %v1160 = vpop.f32.mrf.mxu0
        %v1161 = vadd.f32 0.0, %v1160
        %1162 = vmatmul.f32.gmra.mxu0 %v1099
        %v1163 = vpop.f32.mrf.mxu0
        %v1164 = vadd.f32 0.0, %v1163
        %1165 = vmatmul.f32.gmra.mxu0 %v1102
        %v1166 = vpop.f32.mrf.mxu0
        %v1167 = vadd.f32 0.0, %v1166
        %1168 = vmatmul.f32.gmra.mxu0 %v1105
        %v1169 = vpop.f32.mrf.mxu0
        %v1170 = vadd.f32 0.0, %v1169
        %1171 = vmatmul.f32.gmra.mxu0 %v1108
        %v1172 = vpop.f32.mrf.mxu0
        %v1173 = vadd.f32 0.0, %v1172
        %1174 = vmatmul.f32.gmra.mxu0 %v1111
        %v1175 = vpop.f32.mrf.mxu0
        %v1176 = vadd.f32 0.0, %v1175
        %1177 = vmatmul.f32.gmra.mxu0 %v1114
        %v1178 = vpop.f32.mrf.mxu0
        %v1179 = vadd.f32 0.0, %v1178
        %1180 = vmatmul.f32.gmra.mxu0 %v1117
        %v1181 = vpop.f32.mrf.mxu0
        %v1182 = vadd.f32 0.0, %v1181
        %1183 = vmatmul.f32.gmra.mxu0 %v1120
        %v1184 = vpop.f32.mrf.mxu0
        %v1185 = vadd.f32 0.0, %v1184
        %1186 = vmatmul.f32.gmra.mxu0 %v1123
        %v1187 = vpop.f32.mrf.mxu0
        %v1188 = vadd.f32 0.0, %v1187
        %1189 = vmatmul.f32.gmra.mxu0 %v1126
        %v1190 = vpop.f32.mrf.mxu0
        %v1191 = vadd.f32 0.0, %v1190
        %1192 = vmatmul.f32.gmra.mxu0 %v1129
        %v1193 = vpop.f32.mrf.mxu0
        %v1194 = vadd.f32 0.0, %v1193
        %1195 = vmatmul.f32.gmra.mxu0 %v1132
        %v1196 = vpop.f32.mrf.mxu0
        %v1197 = vadd.f32 0.0, %v1196
        %1198 = vmatmul.f32.gmra.mxu0 %v1135
        %v1199 = vpop.f32.mrf.mxu0
        %v1200 = vadd.f32 0.0, %v1199
        %1201 = vmatmul.f32.gmra.mxu0 %v1138
        %v1202 = vpop.f32.mrf.mxu0
        %v1203 = vadd.f32 0.0, %v1202
        %1204 = vmatmul.f32.gmra.mxu0 %v1141
        %v1205 = vpop.f32.mrf.mxu0
        %v1206 = vadd.f32 0.0, %v1205
        %1207 = vdwg.mxu0
        %v1208 = vrot.slane %v1062, 4
        %v1209 = vadd.f32 %v1062, %v1208
        %v1210 = vrot.slane %v1209, 2
        %v1211 = vadd.f32 %v1209, %v1210
        %v1212 = vrot.slane %v1211, 1
        %v1213 = vadd.f32 %v1211, %v1212
        %v1214 = vmul.f32 %v1161, 0.1
        %v1215 = vmul.f32 %v1164, 0.1
        %v1216 = vmul.f32 %v1167, 0.1
        %v1217 = vmul.f32 %v1170, 0.1
        %v1218 = vmul.f32 %v1173, 0.1
        %v1219 = vmul.f32 %v1176, 0.1
        %v1220 = vmul.f32 %v1179, 0.1
        %v1221 = vmul.f32 %v1182, 0.1
        %v1222 = vmul.f32 %v1185, 0.1
        %v1223 = vmul.f32 %v1188, 0.1
        %v1224 = vmul.f32 %v1191, 0.1
        %v1225 = vmul.f32 %v1194, 0.1
        %v1226 = vmul.f32 %v1197, 0.1
        %v1227 = vmul.f32 %v1200, 0.1
        %v1228 = vmul.f32 %v1203, 0.1
        %v1229 = vmul.f32 %v1206, 0.1
        %v1230 = vsub.f32 %v996, %v1214
        %v1231 = vsub.f32 %v997, %v1215
        %v1232 = vsub.f32 %v998, %v1216
        %v1233 = vsub.f32 %v999, %v1217
        %v1234 = vsub.f32 %v1000, %v1218
        %v1235 = vsub.f32 %v1001, %v1219
        %v1236 = vsub.f32 %v1002, %v1220
        %v1237 = vsub.f32 %v1003, %v1221
        %v1238 = vsub.f32 %v1004, %v1222
        %v1239 = vsub.f32 %v1005, %v1223
        %v1240 = vsub.f32 %v1006, %v1224
        %v1241 = vsub.f32 %v1007, %v1225
        %v1242 = vsub.f32 %v1008, %v1226
        %v1243 = vsub.f32 %v1009, %v1227
        %v1244 = vsub.f32 %v1010, %v1228
        %v1245 = vsub.f32 %v1011, %v1229
        %v1246 = vmul.f32 %v1213, 0.1
        %v1247 = vsub.f32 %v1013, %v1246
        %v1249 = vperm.slane %v1247, 0
        %1251 = vmatpush.msra.mxu0 %v1245
        %1252 = vmatpush.msra.mxu0 %v1244
        %1253 = vmatpush.msra.mxu0 %v1243
        %1254 = vmatpush.msra.mxu0 %v1242
        %1255 = vmatpush.msra.mxu0 %v1241
        %1256 = vmatpush.msra.mxu0 %v1240
        %1257 = vmatpush.msra.mxu0 %v1239
        %1258 = vmatpush.msra.mxu0 %v1238
        %1259 = vmatpush.msra.mxu0 %v1237
        %1260 = vmatpush.msra.mxu0 %v1236
        %1261 = vmatpush.msra.mxu0 %v1235
        %1262 = vmatpush.msra.mxu0 %v1234
        %1263 = vmatpush.msra.mxu0 %v1233
        %1264 = vmatpush.msra.mxu0 %v1232
        %1265 = vmatpush.msra.mxu0 %v1231
        %1266 = vmatpush.msra.mxu0 %v1230
        %1267 = vmatmul.f32.gmra.mxu0 %v1015
        %v1268 = vpop.f32.mrf.mxu0
        %v1269 = vadd.f32 %v1249, %v1268
        %1270 = vdwg.mxu0
        %1271 = vmax.xlane.f32.xlu0 %v1269
        %v1272 = vpop.xlane.xlu0 %1271
        %v1273 = vsub.f32 %v1269, %v1272
        %v1274 = vmul.f32 %v1273, 1.442695
        %v1275 = vpow.pop %v1274
        %1276 = vadd.xlane.f32.xlu0 %v1275
        %v1277 = vpop.xlane.xlu0 %1276
        %v1278 = vrcp.pop %v1277
        %v1279 = vmul.f32 %v1277, %v1278
        %v1280 = vsub.f32 1.0, %v1279
        %v1281 = vmul.f32 %v1278, %v1280
        %v1282 = vadd.f32 %v1278, %v1281
        %vm1283 = vweird.f32 %v1277
        %vm1284 = vweird.f32 %v1278
        %vm1285 = vmor %vm1283, %vm1284
        %v1286 = vsel %vm1285, %v1278, %v1282
        %v1287 = vand.u32 2147483647, %v1277
        %vm1288 = vcmp.eq.f32.partialorder %v1287, 8.507059e+37
        %v1289 = vand.u32 %v1277, 2147483648
        %v1290 = vor.u32 1.1754944e-38, %v1289
        %v1291 = vsel %vm1288, %v1290, %v1286
        %v1292 = vmul.f32 %v1275, %v1291
        %v1293 = vsub.f32 %v1292, %v994
        %v1294 = vmul.f32 %v1293, 0.125
        %1295 = vmatpush.msra.mxu0 0.0
        %1296 = vmatpush.msra.mxu0 0.0
        %1297 = vmatpush.msra.mxu0 0.0
        %1298 = vmatpush.msra.mxu0 0.0
        %1299 = vmatpush.msra.mxu0 0.0
        %1300 = vmatpush.msra.mxu0 0.0
        %1301 = vmatpush.msra.mxu0 0.0
        %1302 = vmatpush.msra.mxu0 0.0
        %1303 = vmatpush.msra.mxu0 0.0
        %1304 = vmatpush.msra.mxu0 0.0
        %1305 = vmatpush.msra.mxu0 0.0
        %1306 = vmatpush.msra.mxu0 0.0
        %1307 = vmatpush.msra.mxu0 0.0
        %1308 = vmatpush.msra.mxu0 0.0
        %1309 = vmatpush.msra.mxu0 0.0
        %1310 = vmatpush.msra.mxu0 %v1294
        %1311 = vmatmul.f32.gmra.mxu0 %v1096
        %v1312 = vpop.f32.mrf.mxu0
        %v1313 = vadd.f32 0.0, %v1312
        %1314 = vmatmul.f32.gmra.mxu0 %v1099
        %v1315 = vpop.f32.mrf.mxu0
        %v1316 = vadd.f32 0.0, %v1315
        %1317 = vmatmul.f32.gmra.mxu0 %v1102
        %v1318 = vpop.f32.mrf.mxu0
        %v1319 = vadd.f32 0.0, %v1318
        %1320 = vmatmul.f32.gmra.mxu0 %v1105
        %v1321 = vpop.f32.mrf.mxu0
        %v1322 = vadd.f32 0.0, %v1321
        %1323 = vmatmul.f32.gmra.mxu0 %v1108
        %v1324 = vpop.f32.mrf.mxu0
        %v1325 = vadd.f32 0.0, %v1324
        %1326 = vmatmul.f32.gmra.mxu0 %v1111
        %v1327 = vpop.f32.mrf.mxu0
        %v1328 = vadd.f32 0.0, %v1327
        %1329 = vmatmul.f32.gmra.mxu0 %v1114
        %v1330 = vpop.f32.mrf.mxu0
        %v1331 = vadd.f32 0.0, %v1330
        %1332 = vmatmul.f32.gmra.mxu0 %v1117
        %v1333 = vpop.f32.mrf.mxu0
        %v1334 = vadd.f32 0.0, %v1333
        %1335 = vmatmul.f32.gmra.mxu0 %v1120
        %v1336 = vpop.f32.mrf.mxu0
        %v1337 = vadd.f32 0.0, %v1336
        %1338 = vmatmul.f32.gmra.mxu0 %v1123
        %v1339 = vpop.f32.mrf.mxu0
        %v1340 = vadd.f32 0.0, %v1339
        %1341 = vmatmul.f32.gmra.mxu0 %v1126
        %v1342 = vpop.f32.mrf.mxu0
        %v1343 = vadd.f32 0.0, %v1342
        %1344 = vmatmul.f32.gmra.mxu0 %v1129
        %v1345 = vpop.f32.mrf.mxu0
        %v1346 = vadd.f32 0.0, %v1345
        %1347 = vmatmul.f32.gmra.mxu0 %v1132
        %v1348 = vpop.f32.mrf.mxu0
        %v1349 = vadd.f32 0.0, %v1348
        %1350 = vmatmul.f32.gmra.mxu0 %v1135
        %v1351 = vpop.f32.mrf.mxu0
        %v1352 = vadd.f32 0.0, %v1351
        %1353 = vmatmul.f32.gmra.mxu0 %v1138
        %v1354 = vpop.f32.mrf.mxu0
        %v1355 = vadd.f32 0.0, %v1354
        %1356 = vmatmul.f32.gmra.mxu0 %v1141
        %v1357 = vpop.f32.mrf.mxu0
        %v1358 = vadd.f32 0.0, %v1357
        %1359 = vdwg.mxu0
        %v1360 = vrot.slane %v1294, 4
        %v1361 = vadd.f32 %v1294, %v1360
        %v1362 = vrot.slane %v1361, 2
        %v1363 = vadd.f32 %v1361, %v1362
        %v1364 = vrot.slane %v1363, 1
        %v1365 = vadd.f32 %v1363, %v1364
        %v1366 = vmul.f32 %v1313, 0.1
        %v1367 = vmul.f32 %v1316, 0.1
        %v1368 = vmul.f32 %v1319, 0.1
        %v1369 = vmul.f32 %v1322, 0.1
        %v1370 = vmul.f32 %v1325, 0.1
        %v1371 = vmul.f32 %v1328, 0.1
        %v1372 = vmul.f32 %v1331, 0.1
        %v1373 = vmul.f32 %v1334, 0.1
        %v1374 = vmul.f32 %v1337, 0.1
        %v1375 = vmul.f32 %v1340, 0.1
        %v1376 = vmul.f32 %v1343, 0.1
        %v1377 = vmul.f32 %v1346, 0.1
        %v1378 = vmul.f32 %v1349, 0.1
        %v1379 = vmul.f32 %v1352, 0.1
        %v1380 = vmul.f32 %v1355, 0.1
        %v1381 = vmul.f32 %v1358, 0.1
        %v1382 = vsub.f32 %v1230, %v1366
        %v1383 = vsub.f32 %v1231, %v1367
        %v1384 = vsub.f32 %v1232, %v1368
        %v1385 = vsub.f32 %v1233, %v1369
        %v1386 = vsub.f32 %v1234, %v1370
        %v1387 = vsub.f32 %v1235, %v1371
        %v1388 = vsub.f32 %v1236, %v1372
        %v1389 = vsub.f32 %v1237, %v1373
        %v1390 = vsub.f32 %v1238, %v1374
        %v1391 = vsub.f32 %v1239, %v1375
        %v1392 = vsub.f32 %v1240, %v1376
        %v1393 = vsub.f32 %v1241, %v1377
        %v1394 = vsub.f32 %v1242, %v1378
        %v1395 = vsub.f32 %v1243, %v1379
        %v1396 = vsub.f32 %v1244, %v1380
        %v1397 = vsub.f32 %v1245, %v1381
        %v1398 = vmul.f32 %v1365, 0.1
        %v1399 = vsub.f32 %v1247, %v1398
        %v1401 = vperm.slane %v1399, 0
        %1403 = vmatpush.msra.mxu0 %v1397
        %1404 = vmatpush.msra.mxu0 %v1396
        %1405 = vmatpush.msra.mxu0 %v1395
        %1406 = vmatpush.msra.mxu0 %v1394
        %1407 = vmatpush.msra.mxu0 %v1393
        %1408 = vmatpush.msra.mxu0 %v1392
        %1409 = vmatpush.msra.mxu0 %v1391
        %1410 = vmatpush.msra.mxu0 %v1390
        %1411 = vmatpush.msra.mxu0 %v1389
        %1412 = vmatpush.msra.mxu0 %v1388
        %1413 = vmatpush.msra.mxu0 %v1387
        %1414 = vmatpush.msra.mxu0 %v1386
        %1415 = vmatpush.msra.mxu0 %v1385
        %1416 = vmatpush.msra.mxu0 %v1384
        %1417 = vmatpush.msra.mxu0 %v1383
        %1418 = vmatpush.msra.mxu0 %v1382
        %1419 = vmatmul.f32.gmra.mxu0 %v1015
        %v1420 = vpop.f32.mrf.mxu0
        %v1421 = vadd.f32 %v1401, %v1420
        %1422 = vdwg.mxu0
        %1423 = vmax.xlane.f32.xlu0 %v1421
        %v1424 = vpop.xlane.xlu0 %1423
        %v1425 = vsub.f32 %v1421, %v1424
        %v1426 = vmul.f32 %v1425, 1.442695
        %v1427 = vpow.pop %v1426
        %1428 = vadd.xlane.f32.xlu0 %v1427
        %v1429 = vpop.xlane.xlu0 %1428
        %v1430 = vrcp.pop %v1429
        %v1431 = vmul.f32 %v1429, %v1430
        %v1432 = vsub.f32 1.0, %v1431
        %v1433 = vmul.f32 %v1430, %v1432
        %v1434 = vadd.f32 %v1430, %v1433
        %vm1435 = vweird.f32 %v1429
        %vm1436 = vweird.f32 %v1430
        %vm1437 = vmor %vm1435, %vm1436
        %v1438 = vsel %vm1437, %v1430, %v1434
        %v1439 = vand.u32 2147483647, %v1429
        %vm1440 = vcmp.eq.f32.partialorder %v1439, 8.507059e+37
        %v1441 = vand.u32 %v1429, 2147483648
        %v1442 = vor.u32 1.1754944e-38, %v1441
        %v1443 = vsel %vm1440, %v1442, %v1438
        %v1444 = vmul.f32 %v1427, %v1443
        %v1445 = vsub.f32 %v1444, %v994
        %v1446 = vmul.f32 %v1445, 0.125
        %1447 = vmatpush.msra.mxu0 0.0
        %1448 = vmatpush.msra.mxu0 0.0
        %1449 = vmatpush.msra.mxu0 0.0
        %1450 = vmatpush.msra.mxu0 0.0
        %1451 = vmatpush.msra.mxu0 0.0
        %1452 = vmatpush.msra.mxu0 0.0
        %1453 = vmatpush.msra.mxu0 0.0
        %1454 = vmatpush.msra.mxu0 0.0
        %1455 = vmatpush.msra.mxu0 0.0
        %1456 = vmatpush.msra.mxu0 0.0
        %1457 = vmatpush.msra.mxu0 0.0
        %1458 = vmatpush.msra.mxu0 0.0
        %1459 = vmatpush.msra.mxu0 0.0
        %1460 = vmatpush.msra.mxu0 0.0
        %1461 = vmatpush.msra.mxu0 0.0
        %1462 = vmatpush.msra.mxu0 %v1446
        %1463 = vmatmul.f32.gmra.mxu0 %v1096
        %v1464 = vpop.f32.mrf.mxu0
        %v1465 = vadd.f32 0.0, %v1464
        %1466 = vmatmul.f32.gmra.mxu0 %v1099
        %v1467 = vpop.f32.mrf.mxu0
        %v1468 = vadd.f32 0.0, %v1467
        %1469 = vmatmul.f32.gmra.mxu0 %v1102
        %v1470 = vpop.f32.mrf.mxu0
        %v1471 = vadd.f32 0.0, %v1470
        %1472 = vmatmul.f32.gmra.mxu0 %v1105
        %v1473 = vpop.f32.mrf.mxu0
        %v1474 = vadd.f32 0.0, %v1473
        %1475 = vmatmul.f32.gmra.mxu0 %v1108
        %v1476 = vpop.f32.mrf.mxu0
        %v1477 = vadd.f32 0.0, %v1476
        %1478 = vmatmul.f32.gmra.mxu0 %v1111
        %v1479 = vpop.f32.mrf.mxu0
        %v1480 = vadd.f32 0.0, %v1479
        %1481 = vmatmul.f32.gmra.mxu0 %v1114
        %v1482 = vpop.f32.mrf.mxu0
        %v1483 = vadd.f32 0.0, %v1482
        %1484 = vmatmul.f32.gmra.mxu0 %v1117
        %v1485 = vpop.f32.mrf.mxu0
        %v1486 = vadd.f32 0.0, %v1485
        %1487 = vmatmul.f32.gmra.mxu0 %v1120
        %v1488 = vpop.f32.mrf.mxu0
        %v1489 = vadd.f32 0.0, %v1488
        %1490 = vmatmul.f32.gmra.mxu0 %v1123
        %v1491 = vpop.f32.mrf.mxu0
        %v1492 = vadd.f32 0.0, %v1491
        %1493 = vmatmul.f32.gmra.mxu0 %v1126
        %v1494 = vpop.f32.mrf.mxu0
        %v1495 = vadd.f32 0.0, %v1494
        %1496 = vmatmul.f32.gmra.mxu0 %v1129
        %v1497 = vpop.f32.mrf.mxu0
        %v1498 = vadd.f32 0.0, %v1497
        %1499 = vmatmul.f32.gmra.mxu0 %v1132
        %v1500 = vpop.f32.mrf.mxu0
        %v1501 = vadd.f32 0.0, %v1500
        %1502 = vmatmul.f32.gmra.mxu0 %v1135
        %v1503 = vpop.f32.mrf.mxu0
        %v1504 = vadd.f32 0.0, %v1503
        %1505 = vmatmul.f32.gmra.mxu0 %v1138
        %v1506 = vpop.f32.mrf.mxu0
        %v1507 = vadd.f32 0.0, %v1506
        %1508 = vmatmul.f32.gmra.mxu0 %v1141
        %v1509 = vpop.f32.mrf.mxu0
        %v1510 = vadd.f32 0.0, %v1509
        %1511 = vdwg.mxu0
        %v1512 = vrot.slane %v1446, 4
        %v1513 = vadd.f32 %v1446, %v1512
        %v1514 = vrot.slane %v1513, 2
        %v1515 = vadd.f32 %v1513, %v1514
        %v1516 = vrot.slane %v1515, 1
        %v1517 = vadd.f32 %v1515, %v1516
        %v1518 = vmul.f32 %v1465, 0.1
        %v1519 = vmul.f32 %v1468, 0.1
        %v1520 = vmul.f32 %v1471, 0.1
        %v1521 = vmul.f32 %v1474, 0.1
        %v1522 = vmul.f32 %v1477, 0.1
        %v1523 = vmul.f32 %v1480, 0.1
        %v1524 = vmul.f32 %v1483, 0.1
        %v1525 = vmul.f32 %v1486, 0.1
        %v1526 = vmul.f32 %v1489, 0.1
        %v1527 = vmul.f32 %v1492, 0.1
        %v1528 = vmul.f32 %v1495, 0.1
        %v1529 = vmul.f32 %v1498, 0.1
        %v1530 = vmul.f32 %v1501, 0.1
        %v1531 = vmul.f32 %v1504, 0.1
        %v1532 = vmul.f32 %v1507, 0.1
        %v1533 = vmul.f32 %v1510, 0.1
        %v1534 = vsub.f32 %v1382, %v1518
        %v1535 = vsub.f32 %v1383, %v1519
        %v1536 = vsub.f32 %v1384, %v1520
        %v1537 = vsub.f32 %v1385, %v1521
        %v1538 = vsub.f32 %v1386, %v1522
        %v1539 = vsub.f32 %v1387, %v1523
        %v1540 = vsub.f32 %v1388, %v1524
        %v1541 = vsub.f32 %v1389, %v1525
        %v1542 = vsub.f32 %v1390, %v1526
        %v1543 = vsub.f32 %v1391, %v1527
        %v1544 = vsub.f32 %v1392, %v1528
        %v1545 = vsub.f32 %v1393, %v1529
        %v1546 = vsub.f32 %v1394, %v1530
        %v1547 = vsub.f32 %v1395, %v1531
        %v1548 = vsub.f32 %v1396, %v1532
        %v1549 = vsub.f32 %v1397, %v1533
        %v1550 = vmul.f32 %v1517, 0.1
        %v1551 = vsub.f32 %v1399, %v1550
        %s1552 = scalar_lea.vmem %s349, 128 [#allocation7]
        %1553 = vst [vmem:[%s1552] sm:$0xff] %v1534
        %1554 = vst [vmem:[%s1552 + $0x8] sm:$0xff] %v1535
        %1555 = vst [vmem:[%s1552 + $0x10] sm:$0xff] %v1536
        %1556 = vst [vmem:[%s1552 + $0x18] sm:$0xff] %v1537
        %1557 = vst [vmem:[%s1552 + $0x20] sm:$0xff] %v1538
        %1558 = vst [vmem:[%s1552 + $0x28] sm:$0xff] %v1539
        %1559 = vst [vmem:[%s1552 + $0x30] sm:$0xff] %v1540
        %1560 = vst [vmem:[%s1552 + $0x38] sm:$0xff] %v1541
        %1561 = vst [vmem:[%s1552 + $0x40] sm:$0xff] %v1542
        %1562 = vst [vmem:[%s1552 + $0x48] sm:$0xff] %v1543
        %1563 = vst [vmem:[%s1552 + $0x50] sm:$0xff] %v1544
        %1564 = vst [vmem:[%s1552 + $0x58] sm:$0xff] %v1545
        %1565 = vst [vmem:[%s1552 + $0x60] sm:$0xff] %v1546
        %1566 = vst [vmem:[%s1552 + $0x68] sm:$0xff] %v1547
        %1567 = vst [vmem:[%s1552 + $0x70] sm:$0xff] %v1548
        %1568 = vst [vmem:[%s1552 + $0x78] sm:$0xff] %v1549
        %s1569 = scalar_lea.vmem %s356, 1 [#allocation8]
        %1570 = vst [vmem:[%s1569] sm:$0x1] %v1551
        %v1571 = vld [vmem:[%s1014] sm:$0xff]
        %v1573 = vperm.slane %v1551, 0
        %1575 = vmatpush.msra.mxu0 %v1549
        %1576 = vmatpush.msra.mxu0 %v1548
        %1577 = vmatpush.msra.mxu0 %v1547
        %1578 = vmatpush.msra.mxu0 %v1546
        %1579 = vmatpush.msra.mxu0 %v1545
        %1580 = vmatpush.msra.mxu0 %v1544
        %1581 = vmatpush.msra.mxu0 %v1543
        %1582 = vmatpush.msra.mxu0 %v1542
        %1583 = vmatpush.msra.mxu0 %v1541
        %1584 = vmatpush.msra.mxu0 %v1540
        %1585 = vmatpush.msra.mxu0 %v1539
        %1586 = vmatpush.msra.mxu0 %v1538
        %1587 = vmatpush.msra.mxu0 %v1537
        %1588 = vmatpush.msra.mxu0 %v1536
        %1589 = vmatpush.msra.mxu0 %v1535
        %1590 = vmatpush.msra.mxu0 %v1534
        %1591 = vmatmul.f32.gmra.mxu0 %v1571
        %v1592 = vpop.f32.mrf.mxu0
        %v1593 = vadd.f32 %v1573, %v1592
        %1594 = vdwg.mxu0
        %s1595 = scalar_lea.vmem %s363, 8 [#allocation10]
        %1596 = vst [vmem:[%s1595] sm:$0xff] %v1593
        %s1597 = sand.u32 %s142, 1
        %s1598 = scalar_lea.sflag [#allocation4], %s1597
        %s1599 = sand.u32 %s142, 1
        %s1600 = smul.addr %s1599, 256
        %s1601 = scalar_lea.vmem [#allocation7], %s1600
        %s1602 = sand.u32 %s30, 1
        %s1603 = scalar_lea.sflag [#allocation9], %s1602
        %s1604 = sand.u32 %s168, 1
        %s1605 = smul.addr %s1604, 2
        %s1606 = scalar_lea.vmem [#allocation8], %s1605
        %s1607 = sand.u32 %s30, 1
        %s1608 = scalar_lea.sflag [#allocation9], %s1607
        %s1609 = sand.u32 %s194, 1
        %s1610 = smul.addr %s1609, 16
        %s1611 = scalar_lea.vmem [#allocation10], %s1610
        // Predicated region
        $region45: #{tpu_custom_call.1} parent=35 // pred_check
          %p1612 = pneg %p152
        $region46: #{tpu_custom_call.1} parent=35 // pred_check_branch
          %1614 = sbr.rel (%p1612) target = $region48
        $region47: #{tpu_custom_call.1} parent=35 // pred_region
          %s1615 = smul.u32 2, %s30
          %1617 = vsyncadd %s1598, 0
          %s1618 = smul.addr %s1615, 16
          %s1619 = smul.addr %s1618, 8
          %s1620 = scalar_lea.hbm %s4, %s1619
          %s1621 = sshll.u32 %s1601, 4
          %s1622 = int_to_ptr.vmem [resolvable:$true] %s1621
          %s1623 = sshll.u32 %s1620, 4
          %s1624 = int_to_ptr.hbm [resolvable:$true] %s1623
          %1629 = dma.vmem_to_hbm [thread:$0]  %s1622, 4096, %s1624, %s1598, 128, 128, 8
        $region48: #{tpu_custom_call.1} parent=35 // pred_fallthru
          _
        // Predicated region
        $region49: #{tpu_custom_call.1} parent=35 // pred_check
          %p1630 = pneg %p178
        $region50: #{tpu_custom_call.1} parent=35 // pred_check_branch
          %1632 = sbr.rel (%p1630) target = $region52
        $region51: #{tpu_custom_call.1} parent=35 // pred_region
          %s1633 = smul.u32 2, %s30
          %1635 = vsyncadd %s1603, 0
          %s1636 = scalar_lea.hbm %s5, %s1633
          %s1637 = sshll.u32 %s1606, 4
          %s1638 = int_to_ptr.vmem [resolvable:$true] %s1637
          %s1639 = sshll.u32 %s1636, 4
          %s1640 = int_to_ptr.hbm [resolvable:$true] %s1639
          %1645 = dma.vmem_to_hbm [thread:$0]  %s1638, 32, %s1640, %s1603, 16, 16, 1
        $region52: #{tpu_custom_call.1} parent=35 // pred_fallthru
          _
        // Predicated region
        $region53: #{tpu_custom_call.1} parent=35 // pred_check
          %p1646 = pneg %p204
        $region54: #{tpu_custom_call.1} parent=35 // pred_check_branch
          %1648 = sbr.rel (%p1646) target = $region56
        $region55: #{tpu_custom_call.1} parent=35 // pred_region
          %s1649 = smul.u32 2, %s30
          %1651 = vsyncadd %s1608, 0
          %s1652 = smul.addr %s1649, 8
          %s1653 = scalar_lea.hbm %s6, %s1652
          %s1654 = sshll.u32 %s1611, 4
          %s1655 = int_to_ptr.vmem [resolvable:$true] %s1654
          %s1656 = sshll.u32 %s1653, 4
          %s1657 = int_to_ptr.hbm [resolvable:$true] %s1656
          %1662 = dma.vmem_to_hbm [thread:$0]  %s1655, 256, %s1657, %s1608, 128, 128, 8
        $region56: #{tpu_custom_call.1} parent=35 // pred_fallthru
          _
      $region36: #{tpu_custom_call.1} parent=5 // pred_fallthru
        _
      %p1663 = scmp.le.s32.totalorder 2, %s25
      // Predicated region
      $region57: #{tpu_custom_call.1} parent=5 // pred_check
        %p1664 = pneg %p1663
      $region58: #{tpu_custom_call.1} parent=5 // pred_check_branch
        %1666 = sbr.rel (%p1664) target = $region60
      $region59: #{tpu_custom_call.1} parent=5 // pred_region
        %s1667 = ssub.s32 %s25, 2
        // Predicated region
        $region61: #{tpu_custom_call.1} parent=59 // pred_check
          %p1668 = pneg %p158
        $region62: #{tpu_custom_call.1} parent=59 // pred_check_branch
          %1670 = sbr.rel (%p1668) target = $region64
        $region63: #{tpu_custom_call.1} parent=59 // pred_region
          %s1671 = sand.u32 %s143, 1
          %s1672 = scalar_lea.sflag [#allocation4], %s1671
          %s1673 = sand.u32 %s143, 1
          %s1674 = smul.addr %s1673, 256
          %s1675 = scalar_lea.vmem [#allocation7], %s1674
          %1677 = dma.done %s1672, 4096
        $region64: #{tpu_custom_call.1} parent=59 // pred_fallthru
          _
        // Predicated region
        $region65: #{tpu_custom_call.1} parent=59 // pred_check
          %p1678 = pneg %p184
        $region66: #{tpu_custom_call.1} parent=59 // pred_check_branch
          %1680 = sbr.rel (%p1678) target = $region68
        $region67: #{tpu_custom_call.1} parent=59 // pred_region
          %s1681 = sand.u32 %s31, 1
          %s1682 = scalar_lea.sflag [#allocation9], %s1681
          %s1683 = sand.u32 %s169, 1
          %s1684 = smul.addr %s1683, 2
          %s1685 = scalar_lea.vmem [#allocation8], %s1684
          %1687 = dma.done %s1682, 32
        $region68: #{tpu_custom_call.1} parent=59 // pred_fallthru
          _
        // Predicated region
        $region69: #{tpu_custom_call.1} parent=59 // pred_check
          %p1688 = pneg %p210
        $region70: #{tpu_custom_call.1} parent=59 // pred_check_branch
          %1690 = sbr.rel (%p1688) target = $region72
        $region71: #{tpu_custom_call.1} parent=59 // pred_region
          %s1691 = sand.u32 %s31, 1
          %s1692 = scalar_lea.sflag [#allocation9], %s1691
          %s1693 = sand.u32 %s195, 1
          %s1694 = smul.addr %s1693, 16
          %s1695 = scalar_lea.vmem [#allocation10], %s1694
          %1697 = dma.done %s1692, 256
        $region72: #{tpu_custom_call.1} parent=59 // pred_fallthru
          _
      $region60: #{tpu_custom_call.1} parent=5 // pred_fallthru
        _
    $region6: #{tpu_custom_call.1} parent=1 // loop_footer
      %s29 = sadd.s32 1, %s25
    $region7: #{tpu_custom_call.1} parent=1 // loop_footer_branch
      %24 = sbr.rel target = $region3
    $region8: #{tpu_custom_call.1} parent=1 // loop_exit
      _
    %1698 = vsyncpa [#allocation3], 1
    %s1699 = scalar_lea.sflag [#allocation3], 1
    %1700 = vsyncpa %s1699, 1
    %1701 = vsyncpa [#allocation6], 1
    %s1702 = scalar_lea.sflag [#allocation6], 1
    %1703 = vsyncpa %s1702, 1
    %1704 = vsyncpa [#allocation4], 1
    %s1705 = scalar_lea.sflag [#allocation4], 1
    %1706 = vsyncpa %s1705, 1
    %1707 = vsyncpa [#allocation9], 1
    %s1708 = scalar_lea.sflag [#allocation9], 1
    %1709 = vsyncpa %s1708, 1

</llo_original>
